<compile_context>
chip_gen: v7x
topology: tpu7x:2x2x1
jax: 0.10.0
libtpu: 0.0.40
codegen_flags: <defaults>
</compile_context>

<pallas_src>
import functools

import jax
import jax.numpy as jnp
from jax.experimental import pallas as pl
from jax.experimental.pallas import tpu as pltpu

# Module constants (attentional_pooling == False branch, so no classifier token concat).
N_EMBED_VALS = 16 * 16   # 256
N_PIXELS = 14 * 14       # 196
N_STATES = 256
BATCH = 2                # small batch for the example run


def _round_up(n, m):
    return ((n + m - 1) // m) * m


def _embed_kernel(tab_ref, onehot_ref, pos_ref, o_ref, *, batch, p_pad):
    # tab_ref    : (S, 2E)         bf16  stacked hi/lo embedding table, transposed
    # onehot_ref : (2E, B*P_pad)   bf16  stacked one-hot (row r selects token r mod E)
    # pos_ref    : (S, P_pad)      f32   positional bias, pre-transposed + lane padded
    # o_ref      : (B, S, P_pad)   f32   output (transposed, lane-dense layout)
    #
    # One K=2E dot per batch element gives table_hi[idx] + table_lo[idx] straight out
    # of the MXU accumulator; add pos and store once (no RMW accumulation).
    for b in range(batch):                                     # unrolled (B=2)
        gathered = jnp.dot(
            tab_ref[...],
            onehot_ref[:, b * p_pad:(b + 1) * p_pad],
            preferred_element_type=jnp.float32,
        )                                                      # (S, P_pad) f32
        o_ref[b] = gathered + pos_ref[...]


def prepare_params(embed_table, pos_embed):
    """One-time parameter prep (hoisted out of the per-call path):
    bf16 hi/lo split stacked along E and transposed to (S, 2E), plus a transposed,
    lane-padded positional bias."""
    n_pixels, _ = pos_embed.shape
    p_pad = _round_up(n_pixels, 128)
    hi = embed_table.astype(jnp.bfloat16)
    lo = (embed_table - hi.astype(jnp.float32)).astype(jnp.bfloat16)   # exact residual
    tab_t = jnp.concatenate([hi, lo], axis=0).T                        # (S, 2E) bf16
    pos_t = jnp.transpose(pos_embed, (1, 0))                           # (S, P)
    pos_t = jnp.pad(pos_t, ((0, 0), (0, p_pad - n_pixels)))            # (S, P_pad)
    return tab_t, pos_t


@jax.jit
def embed_with_positional_bias(x_idx, tab_t, pos_t_pad):
    """x_idx: (B, P) int; tab_t: (S, 2E) bf16; pos_t_pad: (S, P_pad) f32 -> (B, S, P) f32."""
    B, P = x_idx.shape
    S, E2 = tab_t.shape
    E = E2 // 2
    P_pad = pos_t_pad.shape[1]
    assert P_pad % 128 == 0 and S % 8 == 0 and E2 % 128 == 0

    # Flatten batch into the lane dim; pad pixels with an id that never matches (-1).
    idx = jnp.full((B, P_pad), -1, dtype=jnp.int32).at[:, :P].set(x_idx.astype(jnp.int32))
    idx_flat = idx.reshape(1, B * P_pad)

    # Grid-invariant stacked one-hot, built once per call outside the kernel:
    # row r is 1 where idx == (r mod E), so a single K=2E dot against the stacked
    # hi/lo table yields hi[idx] + lo[idx].
    rows = (jnp.arange(E2, dtype=jnp.int32) % E)[:, None]               # (2E, 1)
    onehot = (idx_flat == rows).astype(jnp.bfloat16)                    # (2E, B*P_pad)

    kernel = functools.partial(_embed_kernel, batch=B, p_pad=P_pad)

    out_pad = pl.pallas_call(
        kernel,
        out_shape=jax.ShapeDtypeStruct((B, S, P_pad), jnp.float32),
        grid=(1,),                                            # single step: ~1.5 MiB VMEM
        in_specs=[
            pl.BlockSpec((S, E2), lambda i: (0, 0)),          # stacked table (row-contiguous)
            pl.BlockSpec((E2, B * P_pad), lambda i: (0, 0)),  # stacked one-hot
            pl.BlockSpec((S, P_pad), lambda i: (0, 0)),       # positional bias (transposed)
        ],
        out_specs=pl.BlockSpec((B, S, P_pad), lambda i: (0, 0, 0)),
        compiler_params=pltpu.CompilerParams(
            dimension_semantics=("arbitrary",),
        ),
    )(tab_t, onehot, pos_t_pad)

    # Module contract is (B, n_states, n_pixels); drop the lane padding here.
    # (A padded-layout consumer could skip this slice and keep P_pad lanes.)
    return out_pad[:, :, :P]


if __name__ == "__main__":
    key = jax.random.PRNGKey(0)
    k_tab, k_pos, k_x = jax.random.split(key, 3)

    # Deterministic parameter init matching the module's __init__:
    #   x_embed.weight ~ N(0, 0.02), pos_embed ~ N(0, 0.01)
    embed_table = 0.02 * jax.random.normal(k_tab, (N_EMBED_VALS, N_STATES), jnp.float32)
    pos_embed = 0.01 * jax.random.normal(k_pos, (N_PIXELS, N_STATES), jnp.float32)

    # Discrete inputs: (B, n_pixels) token ids in [0, n_embed_vals)
    x = jax.random.randint(k_x, (BATCH, N_PIXELS), 0, N_EMBED_VALS, dtype=jnp.int32)

    tab_t, pos_t_pad = prepare_params(embed_table, pos_embed)
    out = embed_with_positional_bias(x, tab_t, pos_t_pad)
    out = jax.block_until_ready(out)

    # Reference: embed(x) + pos_embed, then transpose(1, 2)
    ref = jnp.transpose(embed_table[x] + pos_embed[None, :, :], (0, 2, 1))
    assert out.shape == (BATCH, N_STATES, N_PIXELS)
    assert jnp.allclose(out, ref, atol=1e-5, rtol=1e-5)

    print("KERNEL_OK")
</pallas_src>

<mosaic_0001>
module attributes {stable_mosaic.version = 11 : i64} {
  func.func @_embed_kernel(%arg0: i32, %arg1: memref<256x512xbf16, #tpu.memory_space<vmem>>, %arg2: memref<512x512xbf16, #tpu.memory_space<vmem>>, %arg3: memref<256x256xf32, #tpu.memory_space<vmem>>, %arg4: memref<2x256x256xf32, #tpu.memory_space<vmem>>) attributes {dimension_semantics = [#tpu.dimension_semantics<arbitrary>], iteration_bounds = array<i64: 1>, scalar_prefetch = 0 : i64, scratch_operands = 0 : i64, tpu.core_type = #tpu.core_type<tc>, window_params = [{pipeline_mode = #tpu.pipeline_mode<synchronous>, transform_indices = @transform_0, window_bounds = array<i64: 256, 512>}, {pipeline_mode = #tpu.pipeline_mode<synchronous>, transform_indices = @transform_1, window_bounds = array<i64: 512, 512>}, {pipeline_mode = #tpu.pipeline_mode<synchronous>, transform_indices = @transform_2, window_bounds = array<i64: 256, 256>}, {pipeline_mode = #tpu.pipeline_mode<synchronous>, transform_indices = @transform_3, window_bounds = array<i64: 2, 256, 256>}]} {
    %c0 = arith.constant 0 : index
    %c0_0 = arith.constant 0 : index
    %0 = vector.load %arg1[%c0, %c0_0] : memref<256x512xbf16, #tpu.memory_space<vmem>>, vector<256x512xbf16>
    %c0_1 = arith.constant 0 : index
    %c0_2 = arith.constant 0 : index
    %1 = vector.load %arg2[%c0_1, %c0_2] : memref<512x512xbf16, #tpu.memory_space<vmem>>, vector<512x256xbf16>
    %cst = arith.constant dense<0.000000e+00> : vector<256x256xf32>
    %2 = tpu.matmul %0, %1, %cst {dimension_numbers = #tpu.dot_dimension_numbers<[1], [0], [0], [1], [0, 0, 1, 1], [], []>} : vector<256x512xbf16>, vector<512x256xbf16>, vector<256x256xf32> -> vector<256x256xf32>
    %c0_3 = arith.constant 0 : index
    %c0_4 = arith.constant 0 : index
    %3 = vector.load %arg3[%c0_3, %c0_4] : memref<256x256xf32, #tpu.memory_space<vmem>>, vector<256x256xf32>
    %4 = arith.addf %2, %3 : vector<256x256xf32>
    %c0_5 = arith.constant 0 : index
    %c0_6 = arith.constant 0 : index
    %c0_7 = arith.constant 0 : index
    %5 = vector.load %arg4[%c0_5, %c0_6, %c0_7] : memref<2x256x256xf32, #tpu.memory_space<vmem>>, vector<1x256x256xf32>
    %6 = vector.shape_cast %5 : vector<1x256x256xf32> to vector<256x256xf32>
    %7 = vector.shape_cast %4 : vector<256x256xf32> to vector<1x256x256xf32>
    tpu.vector_store %arg4[%c0_5, %c0_6, %c0_7], %7 {strides = array<i32>} : memref<2x256x256xf32, #tpu.memory_space<vmem>>, vector<1x256x256xf32>,
    %c0_8 = arith.constant 0 : index
    %c0_9 = arith.constant 0 : index
    %8 = vector.load %arg1[%c0_8, %c0_9] : memref<256x512xbf16, #tpu.memory_space<vmem>>, vector<256x512xbf16>
    %c0_10 = arith.constant 0 : index
    %c256 = arith.constant 256 : index
    %9 = vector.load %arg2[%c0_10, %c256] : memref<512x512xbf16, #tpu.memory_space<vmem>>, vector<512x256xbf16>
    %cst_11 = arith.constant dense<0.000000e+00> : vector<256x256xf32>
    %10 = tpu.matmul %8, %9, %cst_11 {dimension_numbers = #tpu.dot_dimension_numbers<[1], [0], [0], [1], [0, 0, 1, 1], [], []>} : vector<256x512xbf16>, vector<512x256xbf16>, vector<256x256xf32> -> vector<256x256xf32>
    %c0_12 = arith.constant 0 : index
    %c0_13 = arith.constant 0 : index
    %11 = vector.load %arg3[%c0_12, %c0_13] : memref<256x256xf32, #tpu.memory_space<vmem>>, vector<256x256xf32>
    %12 = arith.addf %10, %11 : vector<256x256xf32>
    %c1 = arith.constant 1 : index
    %c0_14 = arith.constant 0 : index
    %c0_15 = arith.constant 0 : index
    %13 = vector.load %arg4[%c1, %c0_14, %c0_15] : memref<2x256x256xf32, #tpu.memory_space<vmem>>, vector<1x256x256xf32>
    %14 = vector.shape_cast %13 : vector<1x256x256xf32> to vector<256x256xf32>
    %15 = vector.shape_cast %12 : vector<256x256xf32> to vector<1x256x256xf32>
    tpu.vector_store %arg4[%c1, %c0_14, %c0_15], %15 {strides = array<i32>} : memref<2x256x256xf32, #tpu.memory_space<vmem>>, vector<1x256x256xf32>,
    return
  }
  func.func @transform_0(%arg0: i32) -> (i32, i32) {
    %c0_i32 = arith.constant 0 : i32
    %c0_i32_0 = arith.constant 0 : i32
    %c0_i32_1 = arith.constant 0 : i32
    return %c0_i32, %c0_i32_0 : i32, i32
  }
  func.func @transform_1(%arg0: i32) -> (i32, i32) {
    %c0_i32 = arith.constant 0 : i32
    %c0_i32_0 = arith.constant 0 : i32
    %c0_i32_1 = arith.constant 0 : i32
    return %c0_i32, %c0_i32_0 : i32, i32
  }
  func.func @transform_2(%arg0: i32) -> (i32, i32) {
    %c0_i32 = arith.constant 0 : i32
    %c0_i32_0 = arith.constant 0 : i32
    %c0_i32_1 = arith.constant 0 : i32
    return %c0_i32, %c0_i32_0 : i32, i32
  }
  func.func @transform_3(%arg0: i32) -> (i32, i32, i32) {
    %c0_i32 = arith.constant 0 : i32
    %c0_i32_0 = arith.constant 0 : i32
    %c0_i32_1 = arith.constant 0 : i32
    %c0_i32_2 = arith.constant 0 : i32
    return %c0_i32, %c0_i32_0, %c0_i32_1 : i32, i32, i32
  }
}

</mosaic_0001>

<llo_original>
// kernel: embed_with_positional_bias.1
$region0: #{embed_with_positional_bias.1}
  #allocation0 [shape = 'u32[]', space=smem, size = 0x4, offset = 0x4, fixed_abs, tag = 'smem constant byte address 0x4 - core index']
  #allocation1 [shape = 'u32[144,128]{1,0:T(1,128)}', space=vmem, size = 0x12000, scoped, tag = 'internal scratch']
  %s0 = inlined_call_operand.vmem [shape: bf16[256,512], index: 0, kind: input, shape index: {}]
  %s1 = inlined_call_operand.vmem [shape: bf16[512,512], index: 1, kind: input, shape index: {}]
  %s2 = inlined_call_operand.vmem [shape: f32[256,256], index: 2, kind: input, shape index: {}]
  %s3 = inlined_call_operand.vmem [shape: f32[2,256,256], index: 3, kind: output, shape index: {}]
  %s4 = sld [smem:[#allocation0]]
  $region22: #{embed_with_positional_bias.1} parent=0
    _
  %s6 = ssub.s32 1, %s4
  %s7 = scalar_select 0, %s6, %s4
  // Predicated region
  $region2: #{embed_with_positional_bias.1} parent=0 // pred_check
    _
  $region3: #{embed_with_positional_bias.1} parent=0 // pred_check_branch
    %9 = sbr.rel (0) target = $region5
  $region4: #{embed_with_positional_bias.1} parent=0 // pred_region
    _
  $region5: #{embed_with_positional_bias.1} parent=0 // pred_fallthru
    _
  // Predicated region
  $region6: #{embed_with_positional_bias.1} parent=0 // pred_check
    _
  $region7: #{embed_with_positional_bias.1} parent=0 // pred_check_branch
    %11 = sbr.rel (0) target = $region9
  $region8: #{embed_with_positional_bias.1} parent=0 // pred_region
    _
  $region9: #{embed_with_positional_bias.1} parent=0 // pred_fallthru
    _
  // Predicated region
  $region10: #{embed_with_positional_bias.1} parent=0 // pred_check
    _
  $region11: #{embed_with_positional_bias.1} parent=0 // pred_check_branch
    %13 = sbr.rel (0) target = $region13
  $region12: #{embed_with_positional_bias.1} parent=0 // pred_region
    _
  $region13: #{embed_with_positional_bias.1} parent=0 // pred_fallthru
    _
  %v14 = vld [vmem:[%s0] sm:$0xff]
  %v15 = vld [vmem:[%s0 + $0x8] sm:$0xff]
  %v16 = vld [vmem:[%s0 + $0x10] sm:$0xff]
  %v17 = vld [vmem:[%s0 + $0x18] sm:$0xff]
  %v18 = vld [vmem:[%s0 + $0x20] sm:$0xff]
  %v19 = vld [vmem:[%s0 + $0x28] sm:$0xff]
  %v20 = vld [vmem:[%s0 + $0x30] sm:$0xff]
  %v21 = vld [vmem:[%s0 + $0x38] sm:$0xff]
  %v22 = vld [vmem:[%s0 + $0x40] sm:$0xff]
  %v23 = vld [vmem:[%s0 + $0x48] sm:$0xff]
  %v24 = vld [vmem:[%s0 + $0x50] sm:$0xff]
  %v25 = vld [vmem:[%s0 + $0x58] sm:$0xff]
  %v26 = vld [vmem:[%s0 + $0x60] sm:$0xff]
  %v27 = vld [vmem:[%s0 + $0x68] sm:$0xff]
  %v28 = vld [vmem:[%s0 + $0x70] sm:$0xff]
  %v29 = vld [vmem:[%s0 + $0x78] sm:$0xff]
  %v30 = vld [vmem:[%s0 + $0x80] sm:$0xff]
  %v31 = vld [vmem:[%s0 + $0x88] sm:$0xff]
  %v32 = vld [vmem:[%s0 + $0x90] sm:$0xff]
  %v33 = vld [vmem:[%s0 + $0x98] sm:$0xff]
  %v34 = vld [vmem:[%s0 + $0xa0] sm:$0xff]
  %v35 = vld [vmem:[%s0 + $0xa8] sm:$0xff]
  %v36 = vld [vmem:[%s0 + $0xb0] sm:$0xff]
  %v37 = vld [vmem:[%s0 + $0xb8] sm:$0xff]
  %v38 = vld [vmem:[%s0 + $0xc0] sm:$0xff]
  %v39 = vld [vmem:[%s0 + $0xc8] sm:$0xff]
  %v40 = vld [vmem:[%s0 + $0xd0] sm:$0xff]
  %v41 = vld [vmem:[%s0 + $0xd8] sm:$0xff]
  %v42 = vld [vmem:[%s0 + $0xe0] sm:$0xff]
  %v43 = vld [vmem:[%s0 + $0xe8] sm:$0xff]
  %v44 = vld [vmem:[%s0 + $0xf0] sm:$0xff]
  %v45 = vld [vmem:[%s0 + $0xf8] sm:$0xff]
  %v46 = vld [vmem:[%s0 + $0x100] sm:$0xff]
  %v47 = vld [vmem:[%s0 + $0x108] sm:$0xff]
  %v48 = vld [vmem:[%s0 + $0x110] sm:$0xff]
  %v49 = vld [vmem:[%s0 + $0x118] sm:$0xff]
  %v50 = vld [vmem:[%s0 + $0x120] sm:$0xff]
  %v51 = vld [vmem:[%s0 + $0x128] sm:$0xff]
  %v52 = vld [vmem:[%s0 + $0x130] sm:$0xff]
  %v53 = vld [vmem:[%s0 + $0x138] sm:$0xff]
  %v54 = vld [vmem:[%s0 + $0x140] sm:$0xff]
  %v55 = vld [vmem:[%s0 + $0x148] sm:$0xff]
  %v56 = vld [vmem:[%s0 + $0x150] sm:$0xff]
  %v57 = vld [vmem:[%s0 + $0x158] sm:$0xff]
  %v58 = vld [vmem:[%s0 + $0x160] sm:$0xff]
  %v59 = vld [vmem:[%s0 + $0x168] sm:$0xff]
  %v60 = vld [vmem:[%s0 + $0x170] sm:$0xff]
  %v61 = vld [vmem:[%s0 + $0x178] sm:$0xff]
  %v62 = vld [vmem:[%s0 + $0x180] sm:$0xff]
  %v63 = vld [vmem:[%s0 + $0x188] sm:$0xff]
  %v64 = vld [vmem:[%s0 + $0x190] sm:$0xff]
  %v65 = vld [vmem:[%s0 + $0x198] sm:$0xff]
  %v66 = vld [vmem:[%s0 + $0x1a0] sm:$0xff]
  %v67 = vld [vmem:[%s0 + $0x1a8] sm:$0xff]
  %v68 = vld [vmem:[%s0 + $0x1b0] sm:$0xff]
  %v69 = vld [vmem:[%s0 + $0x1b8] sm:$0xff]
  %v70 = vld [vmem:[%s0 + $0x1c0] sm:$0xff]
  %v71 = vld [vmem:[%s0 + $0x1c8] sm:$0xff]
  %v72 = vld [vmem:[%s0 + $0x1d0] sm:$0xff]
  %v73 = vld [vmem:[%s0 + $0x1d8] sm:$0xff]
  %v74 = vld [vmem:[%s0 + $0x1e0] sm:$0xff]
  %v75 = vld [vmem:[%s0 + $0x1e8] sm:$0xff]
  %v76 = vld [vmem:[%s0 + $0x1f0] sm:$0xff]
  %v77 = vld [vmem:[%s0 + $0x1f8] sm:$0xff]
  %v78 = vld [vmem:[%s1] sm:$0xff]
  %v79 = vld [vmem:[%s1 + $0x10] sm:$0xff]
  %v80 = vld [vmem:[%s1 + $0x20] sm:$0xff]
  %v81 = vld [vmem:[%s1 + $0x30] sm:$0xff]
  %v82 = vld [vmem:[%s1 + $0x40] sm:$0xff]
  %v83 = vld [vmem:[%s1 + $0x50] sm:$0xff]
  %v84 = vld [vmem:[%s1 + $0x60] sm:$0xff]
  %v85 = vld [vmem:[%s1 + $0x70] sm:$0xff]
  %v86 = vld [vmem:[%s1 + $0x80] sm:$0xff]
  %v87 = vld [vmem:[%s1 + $0x90] sm:$0xff]
  %v88 = vld [vmem:[%s1 + $0xa0] sm:$0xff]
  %v89 = vld [vmem:[%s1 + $0xb0] sm:$0xff]
  %v90 = vld [vmem:[%s1 + $0xc0] sm:$0xff]
  %v91 = vld [vmem:[%s1 + $0xd0] sm:$0xff]
  %v92 = vld [vmem:[%s1 + $0xe0] sm:$0xff]
  %v93 = vld [vmem:[%s1 + $0xf0] sm:$0xff]
  %v94 = vld [vmem:[%s1 + $0x100] sm:$0xff]
  %v95 = vld [vmem:[%s1 + $0x110] sm:$0xff]
  %v96 = vld [vmem:[%s1 + $0x120] sm:$0xff]
  %v97 = vld [vmem:[%s1 + $0x130] sm:$0xff]
  %v98 = vld [vmem:[%s1 + $0x140] sm:$0xff]
  %v99 = vld [vmem:[%s1 + $0x150] sm:$0xff]
  %v100 = vld [vmem:[%s1 + $0x160] sm:$0xff]
  %v101 = vld [vmem:[%s1 + $0x170] sm:$0xff]
  %v102 = vld [vmem:[%s1 + $0x180] sm:$0xff]
  %v103 = vld [vmem:[%s1 + $0x190] sm:$0xff]
  %v104 = vld [vmem:[%s1 + $0x1a0] sm:$0xff]
  %v105 = vld [vmem:[%s1 + $0x1b0] sm:$0xff]
  %v106 = vld [vmem:[%s1 + $0x1c0] sm:$0xff]
  %v107 = vld [vmem:[%s1 + $0x1d0] sm:$0xff]
  %v108 = vld [vmem:[%s1 + $0x1e0] sm:$0xff]
  %v109 = vld [vmem:[%s1 + $0x1f0] sm:$0xff]
  %v110 = vld [vmem:[%s1 + $0x200] sm:$0xff]
  %v111 = vld [vmem:[%s1 + $0x210] sm:$0xff]
  %v112 = vld [vmem:[%s1 + $0x220] sm:$0xff]
  %v113 = vld [vmem:[%s1 + $0x230] sm:$0xff]
  %v114 = vld [vmem:[%s1 + $0x240] sm:$0xff]
  %v115 = vld [vmem:[%s1 + $0x250] sm:$0xff]
  %v116 = vld [vmem:[%s1 + $0x260] sm:$0xff]
  %v117 = vld [vmem:[%s1 + $0x270] sm:$0xff]
  %v118 = vld [vmem:[%s1 + $0x280] sm:$0xff]
  %v119 = vld [vmem:[%s1 + $0x290] sm:$0xff]
  %v120 = vld [vmem:[%s1 + $0x2a0] sm:$0xff]
  %v121 = vld [vmem:[%s1 + $0x2b0] sm:$0xff]
  %v122 = vld [vmem:[%s1 + $0x2c0] sm:$0xff]
  %v123 = vld [vmem:[%s1 + $0x2d0] sm:$0xff]
  %v124 = vld [vmem:[%s1 + $0x2e0] sm:$0xff]
  %v125 = vld [vmem:[%s1 + $0x2f0] sm:$0xff]
  %v126 = vld [vmem:[%s1 + $0x300] sm:$0xff]
  %v127 = vld [vmem:[%s1 + $0x310] sm:$0xff]
  %v128 = vld [vmem:[%s1 + $0x320] sm:$0xff]
  %v129 = vld [vmem:[%s1 + $0x330] sm:$0xff]
  %v130 = vld [vmem:[%s1 + $0x340] sm:$0xff]
  %v131 = vld [vmem:[%s1 + $0x350] sm:$0xff]
  %v132 = vld [vmem:[%s1 + $0x360] sm:$0xff]
  %v133 = vld [vmem:[%s1 + $0x370] sm:$0xff]
  %v134 = vld [vmem:[%s1 + $0x380] sm:$0xff]
  %v135 = vld [vmem:[%s1 + $0x390] sm:$0xff]
  %v136 = vld [vmem:[%s1 + $0x3a0] sm:$0xff]
  %v137 = vld [vmem:[%s1 + $0x3b0] sm:$0xff]
  %v138 = vld [vmem:[%s1 + $0x3c0] sm:$0xff]
  %v139 = vld [vmem:[%s1 + $0x3d0] sm:$0xff]
  %v140 = vld [vmem:[%s1 + $0x3e0] sm:$0xff]
  %v141 = vld [vmem:[%s1 + $0x3f0] sm:$0xff]
  %v142 = vld [vmem:[%s2] sm:$0xff]
  %v143 = vld [vmem:[%s2 + $0x8] sm:$0xff]
  %v144 = vld [vmem:[%s2 + $0x10] sm:$0xff]
  %v145 = vld [vmem:[%s2 + $0x18] sm:$0xff]
  %v146 = vld [vmem:[%s2 + $0x20] sm:$0xff]
  %v147 = vld [vmem:[%s2 + $0x28] sm:$0xff]
  %v148 = vld [vmem:[%s2 + $0x30] sm:$0xff]
  %v149 = vld [vmem:[%s2 + $0x38] sm:$0xff]
  %v150 = vld [vmem:[%s2 + $0x40] sm:$0xff]
  %v151 = vld [vmem:[%s2 + $0x48] sm:$0xff]
  %v152 = vld [vmem:[%s2 + $0x50] sm:$0xff]
  %v153 = vld [vmem:[%s2 + $0x58] sm:$0xff]
  %v154 = vld [vmem:[%s2 + $0x60] sm:$0xff]
  %v155 = vld [vmem:[%s2 + $0x68] sm:$0xff]
  %v156 = vld [vmem:[%s2 + $0x70] sm:$0xff]
  %v157 = vld [vmem:[%s2 + $0x78] sm:$0xff]
  %v158 = vld [vmem:[%s2 + $0x80] sm:$0xff]
  %v159 = vld [vmem:[%s2 + $0x88] sm:$0xff]
  %v160 = vld [vmem:[%s2 + $0x90] sm:$0xff]
  %v161 = vld [vmem:[%s2 + $0x98] sm:$0xff]
  %v162 = vld [vmem:[%s2 + $0xa0] sm:$0xff]
  %v163 = vld [vmem:[%s2 + $0xa8] sm:$0xff]
  %v164 = vld [vmem:[%s2 + $0xb0] sm:$0xff]
  %v165 = vld [vmem:[%s2 + $0xb8] sm:$0xff]
  %v166 = vld [vmem:[%s2 + $0xc0] sm:$0xff]
  %v167 = vld [vmem:[%s2 + $0xc8] sm:$0xff]
  %v168 = vld [vmem:[%s2 + $0xd0] sm:$0xff]
  %v169 = vld [vmem:[%s2 + $0xd8] sm:$0xff]
  %v170 = vld [vmem:[%s2 + $0xe0] sm:$0xff]
  %v171 = vld [vmem:[%s2 + $0xe8] sm:$0xff]
  %v172 = vld [vmem:[%s2 + $0xf0] sm:$0xff]
  %v173 = vld [vmem:[%s2 + $0xf8] sm:$0xff]
  %v174 = vld [vmem:[%s2 + $0x100] sm:$0xff]
  %v175 = vld [vmem:[%s2 + $0x108] sm:$0xff]
  %v176 = vld [vmem:[%s2 + $0x110] sm:$0xff]
  %v177 = vld [vmem:[%s2 + $0x118] sm:$0xff]
  %v178 = vld [vmem:[%s2 + $0x120] sm:$0xff]
  %v179 = vld [vmem:[%s2 + $0x128] sm:$0xff]
  %v180 = vld [vmem:[%s2 + $0x130] sm:$0xff]
  %v181 = vld [vmem:[%s2 + $0x138] sm:$0xff]
  %v182 = vld [vmem:[%s2 + $0x140] sm:$0xff]
  %v183 = vld [vmem:[%s2 + $0x148] sm:$0xff]
  %v184 = vld [vmem:[%s2 + $0x150] sm:$0xff]
  %v185 = vld [vmem:[%s2 + $0x158] sm:$0xff]
  %v186 = vld [vmem:[%s2 + $0x160] sm:$0xff]
  %v187 = vld [vmem:[%s2 + $0x168] sm:$0xff]
  %v188 = vld [vmem:[%s2 + $0x170] sm:$0xff]
  %v189 = vld [vmem:[%s2 + $0x178] sm:$0xff]
  %v190 = vld [vmem:[%s2 + $0x180] sm:$0xff]
  %v191 = vld [vmem:[%s2 + $0x188] sm:$0xff]
  %v192 = vld [vmem:[%s2 + $0x190] sm:$0xff]
  %v193 = vld [vmem:[%s2 + $0x198] sm:$0xff]
  %v194 = vld [vmem:[%s2 + $0x1a0] sm:$0xff]
  %v195 = vld [vmem:[%s2 + $0x1a8] sm:$0xff]
  %v196 = vld [vmem:[%s2 + $0x1b0] sm:$0xff]
  %v197 = vld [vmem:[%s2 + $0x1b8] sm:$0xff]
  %v198 = vld [vmem:[%s2 + $0x1c0] sm:$0xff]
  %v199 = vld [vmem:[%s2 + $0x1c8] sm:$0xff]
  %v200 = vld [vmem:[%s2 + $0x1d0] sm:$0xff]
  %v201 = vld [vmem:[%s2 + $0x1d8] sm:$0xff]
  %v202 = vld [vmem:[%s2 + $0x1e0] sm:$0xff]
  %v203 = vld [vmem:[%s2 + $0x1e8] sm:$0xff]
  %v204 = vld [vmem:[%s2 + $0x1f0] sm:$0xff]
  %v205 = vld [vmem:[%s2 + $0x1f8] sm:$0xff]
  %v270 = vunpack.c.l.b16 %v14
  %v271 = vunpack.c.h.b16 %v14
  %v272 = vunpack.c.l.b16 %v15
  %v273 = vunpack.c.h.b16 %v15
  %v274 = vunpack.c.l.b16 %v16
  %v275 = vunpack.c.h.b16 %v16
  %v276 = vunpack.c.l.b16 %v17
  %v277 = vunpack.c.h.b16 %v17
  %v278 = vunpack.c.l.b16 %v18
  %v279 = vunpack.c.h.b16 %v18
  %v280 = vunpack.c.l.b16 %v19
  %v281 = vunpack.c.h.b16 %v19
  %v282 = vunpack.c.l.b16 %v20
  %v283 = vunpack.c.h.b16 %v20
  %v284 = vunpack.c.l.b16 %v21
  %v285 = vunpack.c.h.b16 %v21
  %v286 = vunpack.c.l.b16 %v22
  %v287 = vunpack.c.h.b16 %v22
  %v288 = vunpack.c.l.b16 %v23
  %v289 = vunpack.c.h.b16 %v23
  %v290 = vunpack.c.l.b16 %v24
  %v291 = vunpack.c.h.b16 %v24
  %v292 = vunpack.c.l.b16 %v25
  %v293 = vunpack.c.h.b16 %v25
  %v294 = vunpack.c.l.b16 %v26
  %v295 = vunpack.c.h.b16 %v26
  %v296 = vunpack.c.l.b16 %v27
  %v297 = vunpack.c.h.b16 %v27
  %v298 = vunpack.c.l.b16 %v28
  %v299 = vunpack.c.h.b16 %v28
  %v300 = vunpack.c.l.b16 %v29
  %v301 = vunpack.c.h.b16 %v29
  %v302 = vunpack.c.l.b16 %v30
  %v303 = vunpack.c.h.b16 %v30
  %v304 = vunpack.c.l.b16 %v31
  %v305 = vunpack.c.h.b16 %v31
  %v306 = vunpack.c.l.b16 %v32
  %v307 = vunpack.c.h.b16 %v32
  %v308 = vunpack.c.l.b16 %v33
  %v309 = vunpack.c.h.b16 %v33
  %v310 = vunpack.c.l.b16 %v34
  %v311 = vunpack.c.h.b16 %v34
  %v312 = vunpack.c.l.b16 %v35
  %v313 = vunpack.c.h.b16 %v35
  %v314 = vunpack.c.l.b16 %v36
  %v315 = vunpack.c.h.b16 %v36
  %v316 = vunpack.c.l.b16 %v37
  %v317 = vunpack.c.h.b16 %v37
  %v318 = vunpack.c.l.b16 %v38
  %v319 = vunpack.c.h.b16 %v38
  %v320 = vunpack.c.l.b16 %v39
  %v321 = vunpack.c.h.b16 %v39
  %v322 = vunpack.c.l.b16 %v40
  %v323 = vunpack.c.h.b16 %v40
  %v324 = vunpack.c.l.b16 %v41
  %v325 = vunpack.c.h.b16 %v41
  %v326 = vunpack.c.l.b16 %v42
  %v327 = vunpack.c.h.b16 %v42
  %v328 = vunpack.c.l.b16 %v43
  %v329 = vunpack.c.h.b16 %v43
  %v330 = vunpack.c.l.b16 %v44
  %v331 = vunpack.c.h.b16 %v44
  %v332 = vunpack.c.l.b16 %v45
  %v333 = vunpack.c.h.b16 %v45
  %v334 = vunpack.c.l.b16 %v46
  %v335 = vunpack.c.h.b16 %v46
  %v336 = vunpack.c.l.b16 %v47
  %v337 = vunpack.c.h.b16 %v47
  %v338 = vunpack.c.l.b16 %v48
  %v339 = vunpack.c.h.b16 %v48
  %v340 = vunpack.c.l.b16 %v49
  %v341 = vunpack.c.h.b16 %v49
  %v342 = vunpack.c.l.b16 %v50
  %v343 = vunpack.c.h.b16 %v50
  %v344 = vunpack.c.l.b16 %v51
  %v345 = vunpack.c.h.b16 %v51
  %v346 = vunpack.c.l.b16 %v52
  %v347 = vunpack.c.h.b16 %v52
  %v348 = vunpack.c.l.b16 %v53
  %v349 = vunpack.c.h.b16 %v53
  %v350 = vunpack.c.l.b16 %v54
  %v351 = vunpack.c.h.b16 %v54
  %v352 = vunpack.c.l.b16 %v55
  %v353 = vunpack.c.h.b16 %v55
  %v354 = vunpack.c.l.b16 %v56
  %v355 = vunpack.c.h.b16 %v56
  %v356 = vunpack.c.l.b16 %v57
  %v357 = vunpack.c.h.b16 %v57
  %v358 = vunpack.c.l.b16 %v58
  %v359 = vunpack.c.h.b16 %v58
  %v360 = vunpack.c.l.b16 %v59
  %v361 = vunpack.c.h.b16 %v59
  %v362 = vunpack.c.l.b16 %v60
  %v363 = vunpack.c.h.b16 %v60
  %v364 = vunpack.c.l.b16 %v61
  %v365 = vunpack.c.h.b16 %v61
  %v366 = vunpack.c.l.b16 %v62
  %v367 = vunpack.c.h.b16 %v62
  %v368 = vunpack.c.l.b16 %v63
  %v369 = vunpack.c.h.b16 %v63
  %v370 = vunpack.c.l.b16 %v64
  %v371 = vunpack.c.h.b16 %v64
  %v372 = vunpack.c.l.b16 %v65
  %v373 = vunpack.c.h.b16 %v65
  %v374 = vunpack.c.l.b16 %v66
  %v375 = vunpack.c.h.b16 %v66
  %v376 = vunpack.c.l.b16 %v67
  %v377 = vunpack.c.h.b16 %v67
  %v378 = vunpack.c.l.b16 %v68
  %v379 = vunpack.c.h.b16 %v68
  %v380 = vunpack.c.l.b16 %v69
  %v381 = vunpack.c.h.b16 %v69
  %v382 = vunpack.c.l.b16 %v70
  %v383 = vunpack.c.h.b16 %v70
  %v384 = vunpack.c.l.b16 %v71
  %v385 = vunpack.c.h.b16 %v71
  %v386 = vunpack.c.l.b16 %v72
  %v387 = vunpack.c.h.b16 %v72
  %v388 = vunpack.c.l.b16 %v73
  %v389 = vunpack.c.h.b16 %v73
  %v390 = vunpack.c.l.b16 %v74
  %v391 = vunpack.c.h.b16 %v74
  %v392 = vunpack.c.l.b16 %v75
  %v393 = vunpack.c.h.b16 %v75
  %v394 = vunpack.c.l.b16 %v76
  %v395 = vunpack.c.h.b16 %v76
  %v396 = vunpack.c.l.b16 %v77
  %v397 = vunpack.c.h.b16 %v77
  %v398 = vpack.c.b16 %v274, %v270
  %v399 = vpack.c.b16 %v275, %v271
  %v400 = vpack.c.b16 %v276, %v272
  %v401 = vpack.c.b16 %v277, %v273
  %v402 = vpack.c.b16 %v282, %v278
  %v403 = vpack.c.b16 %v283, %v279
  %v404 = vpack.c.b16 %v284, %v280
  %v405 = vpack.c.b16 %v285, %v281
  %v406 = vpack.c.b16 %v290, %v286
  %v407 = vpack.c.b16 %v291, %v287
  %v408 = vpack.c.b16 %v292, %v288
  %v409 = vpack.c.b16 %v293, %v289
  %v410 = vpack.c.b16 %v298, %v294
  %v411 = vpack.c.b16 %v299, %v295
  %v412 = vpack.c.b16 %v300, %v296
  %v413 = vpack.c.b16 %v301, %v297
  %v414 = vpack.c.b16 %v306, %v302
  %v415 = vpack.c.b16 %v307, %v303
  %v416 = vpack.c.b16 %v308, %v304
  %v417 = vpack.c.b16 %v309, %v305
  %v418 = vpack.c.b16 %v314, %v310
  %v419 = vpack.c.b16 %v315, %v311
  %v420 = vpack.c.b16 %v316, %v312
  %v421 = vpack.c.b16 %v317, %v313
  %v422 = vpack.c.b16 %v322, %v318
  %v423 = vpack.c.b16 %v323, %v319
  %v424 = vpack.c.b16 %v324, %v320
  %v425 = vpack.c.b16 %v325, %v321
  %v426 = vpack.c.b16 %v330, %v326
  %v427 = vpack.c.b16 %v331, %v327
  %v428 = vpack.c.b16 %v332, %v328
  %v429 = vpack.c.b16 %v333, %v329
  %v430 = vpack.c.b16 %v338, %v334
  %v431 = vpack.c.b16 %v339, %v335
  %v432 = vpack.c.b16 %v340, %v336
  %v433 = vpack.c.b16 %v341, %v337
  %v434 = vpack.c.b16 %v346, %v342
  %v435 = vpack.c.b16 %v347, %v343
  %v436 = vpack.c.b16 %v348, %v344
  %v437 = vpack.c.b16 %v349, %v345
  %v438 = vpack.c.b16 %v354, %v350
  %v439 = vpack.c.b16 %v355, %v351
  %v440 = vpack.c.b16 %v356, %v352
  %v441 = vpack.c.b16 %v357, %v353
  %v442 = vpack.c.b16 %v362, %v358
  %v443 = vpack.c.b16 %v363, %v359
  %v444 = vpack.c.b16 %v364, %v360
  %v445 = vpack.c.b16 %v365, %v361
  %v446 = vpack.c.b16 %v370, %v366
  %v447 = vpack.c.b16 %v371, %v367
  %v448 = vpack.c.b16 %v372, %v368
  %v449 = vpack.c.b16 %v373, %v369
  %v450 = vpack.c.b16 %v378, %v374
  %v451 = vpack.c.b16 %v379, %v375
  %v452 = vpack.c.b16 %v380, %v376
  %v453 = vpack.c.b16 %v381, %v377
  %v454 = vpack.c.b16 %v386, %v382
  %v455 = vpack.c.b16 %v387, %v383
  %v456 = vpack.c.b16 %v388, %v384
  %v457 = vpack.c.b16 %v389, %v385
  %v458 = vpack.c.b16 %v394, %v390
  %v459 = vpack.c.b16 %v395, %v391
  %v460 = vpack.c.b16 %v396, %v392
  %v461 = vpack.c.b16 %v397, %v393
  %v590 = vunpack.c.l.b16 %v78
  %v591 = vunpack.c.h.b16 %v78
  %v592 = vunpack.c.l.b16 %v79
  %v593 = vunpack.c.h.b16 %v79
  %v594 = vunpack.c.l.b16 %v80
  %v595 = vunpack.c.h.b16 %v80
  %v596 = vunpack.c.l.b16 %v81
  %v597 = vunpack.c.h.b16 %v81
  %v598 = vunpack.c.l.b16 %v82
  %v599 = vunpack.c.h.b16 %v82
  %v600 = vunpack.c.l.b16 %v83
  %v601 = vunpack.c.h.b16 %v83
  %v602 = vunpack.c.l.b16 %v84
  %v603 = vunpack.c.h.b16 %v84
  %v604 = vunpack.c.l.b16 %v85
  %v605 = vunpack.c.h.b16 %v85
  %v606 = vunpack.c.l.b16 %v86
  %v607 = vunpack.c.h.b16 %v86
  %v608 = vunpack.c.l.b16 %v87
  %v609 = vunpack.c.h.b16 %v87
  %v610 = vunpack.c.l.b16 %v88
  %v611 = vunpack.c.h.b16 %v88
  %v612 = vunpack.c.l.b16 %v89
  %v613 = vunpack.c.h.b16 %v89
  %v614 = vunpack.c.l.b16 %v90
  %v615 = vunpack.c.h.b16 %v90
  %v616 = vunpack.c.l.b16 %v91
  %v617 = vunpack.c.h.b16 %v91
  %v618 = vunpack.c.l.b16 %v92
  %v619 = vunpack.c.h.b16 %v92
  %v620 = vunpack.c.l.b16 %v93
  %v621 = vunpack.c.h.b16 %v93
  %v622 = vunpack.c.l.b16 %v94
  %v623 = vunpack.c.h.b16 %v94
  %v624 = vunpack.c.l.b16 %v95
  %v625 = vunpack.c.h.b16 %v95
  %v626 = vunpack.c.l.b16 %v96
  %v627 = vunpack.c.h.b16 %v96
  %v628 = vunpack.c.l.b16 %v97
  %v629 = vunpack.c.h.b16 %v97
  %v630 = vunpack.c.l.b16 %v98
  %v631 = vunpack.c.h.b16 %v98
  %v632 = vunpack.c.l.b16 %v99
  %v633 = vunpack.c.h.b16 %v99
  %v634 = vunpack.c.l.b16 %v100
  %v635 = vunpack.c.h.b16 %v100
  %v636 = vunpack.c.l.b16 %v101
  %v637 = vunpack.c.h.b16 %v101
  %v638 = vunpack.c.l.b16 %v102
  %v639 = vunpack.c.h.b16 %v102
  %v640 = vunpack.c.l.b16 %v103
  %v641 = vunpack.c.h.b16 %v103
  %v642 = vunpack.c.l.b16 %v104
  %v643 = vunpack.c.h.b16 %v104
  %v644 = vunpack.c.l.b16 %v105
  %v645 = vunpack.c.h.b16 %v105
  %v646 = vunpack.c.l.b16 %v106
  %v647 = vunpack.c.h.b16 %v106
  %v648 = vunpack.c.l.b16 %v107
  %v649 = vunpack.c.h.b16 %v107
  %v650 = vunpack.c.l.b16 %v108
  %v651 = vunpack.c.h.b16 %v108
  %v652 = vunpack.c.l.b16 %v109
  %v653 = vunpack.c.h.b16 %v109
  %v654 = vunpack.c.l.b16 %v110
  %v655 = vunpack.c.h.b16 %v110
  %v656 = vunpack.c.l.b16 %v111
  %v657 = vunpack.c.h.b16 %v111
  %v658 = vunpack.c.l.b16 %v112
  %v659 = vunpack.c.h.b16 %v112
  %v660 = vunpack.c.l.b16 %v113
  %v661 = vunpack.c.h.b16 %v113
  %v662 = vunpack.c.l.b16 %v114
  %v663 = vunpack.c.h.b16 %v114
  %v664 = vunpack.c.l.b16 %v115
  %v665 = vunpack.c.h.b16 %v115
  %v666 = vunpack.c.l.b16 %v116
  %v667 = vunpack.c.h.b16 %v116
  %v668 = vunpack.c.l.b16 %v117
  %v669 = vunpack.c.h.b16 %v117
  %v670 = vunpack.c.l.b16 %v118
  %v671 = vunpack.c.h.b16 %v118
  %v672 = vunpack.c.l.b16 %v119
  %v673 = vunpack.c.h.b16 %v119
  %v674 = vunpack.c.l.b16 %v120
  %v675 = vunpack.c.h.b16 %v120
  %v676 = vunpack.c.l.b16 %v121
  %v677 = vunpack.c.h.b16 %v121
  %v678 = vunpack.c.l.b16 %v122
  %v679 = vunpack.c.h.b16 %v122
  %v680 = vunpack.c.l.b16 %v123
  %v681 = vunpack.c.h.b16 %v123
  %v682 = vunpack.c.l.b16 %v124
  %v683 = vunpack.c.h.b16 %v124
  %v684 = vunpack.c.l.b16 %v125
  %v685 = vunpack.c.h.b16 %v125
  %v686 = vunpack.c.l.b16 %v126
  %v687 = vunpack.c.h.b16 %v126
  %v688 = vunpack.c.l.b16 %v127
  %v689 = vunpack.c.h.b16 %v127
  %v690 = vunpack.c.l.b16 %v128
  %v691 = vunpack.c.h.b16 %v128
  %v692 = vunpack.c.l.b16 %v129
  %v693 = vunpack.c.h.b16 %v129
  %v694 = vunpack.c.l.b16 %v130
  %v695 = vunpack.c.h.b16 %v130
  %v696 = vunpack.c.l.b16 %v131
  %v697 = vunpack.c.h.b16 %v131
  %v698 = vunpack.c.l.b16 %v132
  %v699 = vunpack.c.h.b16 %v132
  %v700 = vunpack.c.l.b16 %v133
  %v701 = vunpack.c.h.b16 %v133
  %v702 = vunpack.c.l.b16 %v134
  %v703 = vunpack.c.h.b16 %v134
  %v704 = vunpack.c.l.b16 %v135
  %v705 = vunpack.c.h.b16 %v135
  %v706 = vunpack.c.l.b16 %v136
  %v707 = vunpack.c.h.b16 %v136
  %v708 = vunpack.c.l.b16 %v137
  %v709 = vunpack.c.h.b16 %v137
  %v710 = vunpack.c.l.b16 %v138
  %v711 = vunpack.c.h.b16 %v138
  %v712 = vunpack.c.l.b16 %v139
  %v713 = vunpack.c.h.b16 %v139
  %v714 = vunpack.c.l.b16 %v140
  %v715 = vunpack.c.h.b16 %v140
  %v716 = vunpack.c.l.b16 %v141
  %v717 = vunpack.c.h.b16 %v141
  %v718 = vpack.c.b16 %v592, %v590
  %v719 = vpack.c.b16 %v593, %v591
  %v720 = vpack.c.b16 %v596, %v594
  %v721 = vpack.c.b16 %v597, %v595
  %v722 = vpack.c.b16 %v600, %v598
  %v723 = vpack.c.b16 %v601, %v599
  %v724 = vpack.c.b16 %v604, %v602
  %v725 = vpack.c.b16 %v605, %v603
  %v726 = vpack.c.b16 %v608, %v606
  %v727 = vpack.c.b16 %v609, %v607
  %v728 = vpack.c.b16 %v612, %v610
  %v729 = vpack.c.b16 %v613, %v611
  %v730 = vpack.c.b16 %v616, %v614
  %v731 = vpack.c.b16 %v617, %v615
  %v732 = vpack.c.b16 %v620, %v618
  %v733 = vpack.c.b16 %v621, %v619
  %v734 = vpack.c.b16 %v624, %v622
  %v735 = vpack.c.b16 %v625, %v623
  %v736 = vpack.c.b16 %v628, %v626
  %v737 = vpack.c.b16 %v629, %v627
  %v738 = vpack.c.b16 %v632, %v630
  %v739 = vpack.c.b16 %v633, %v631
  %v740 = vpack.c.b16 %v636, %v634
  %v741 = vpack.c.b16 %v637, %v635
  %v742 = vpack.c.b16 %v640, %v638
  %v743 = vpack.c.b16 %v641, %v639
  %v744 = vpack.c.b16 %v644, %v642
  %v745 = vpack.c.b16 %v645, %v643
  %v746 = vpack.c.b16 %v648, %v646
  %v747 = vpack.c.b16 %v649, %v647
  %v748 = vpack.c.b16 %v652, %v650
  %v749 = vpack.c.b16 %v653, %v651
  %v750 = vpack.c.b16 %v656, %v654
  %v751 = vpack.c.b16 %v657, %v655
  %v752 = vpack.c.b16 %v660, %v658
  %v753 = vpack.c.b16 %v661, %v659
  %v754 = vpack.c.b16 %v664, %v662
  %v755 = vpack.c.b16 %v665, %v663
  %v756 = vpack.c.b16 %v668, %v666
  %v757 = vpack.c.b16 %v669, %v667
  %v758 = vpack.c.b16 %v672, %v670
  %v759 = vpack.c.b16 %v673, %v671
  %v760 = vpack.c.b16 %v676, %v674
  %v761 = vpack.c.b16 %v677, %v675
  %v762 = vpack.c.b16 %v680, %v678
  %v763 = vpack.c.b16 %v681, %v679
  %v764 = vpack.c.b16 %v684, %v682
  %v765 = vpack.c.b16 %v685, %v683
  %v766 = vpack.c.b16 %v688, %v686
  %v767 = vpack.c.b16 %v689, %v687
  %v768 = vpack.c.b16 %v692, %v690
  %v769 = vpack.c.b16 %v693, %v691
  %v770 = vpack.c.b16 %v696, %v694
  %v771 = vpack.c.b16 %v697, %v695
  %v772 = vpack.c.b16 %v700, %v698
  %v773 = vpack.c.b16 %v701, %v699
  %v774 = vpack.c.b16 %v704, %v702
  %v775 = vpack.c.b16 %v705, %v703
  %v776 = vpack.c.b16 %v708, %v706
  %v777 = vpack.c.b16 %v709, %v707
  %v778 = vpack.c.b16 %v712, %v710
  %v779 = vpack.c.b16 %v713, %v711
  %v780 = vpack.c.b16 %v716, %v714
  %v781 = vpack.c.b16 %v717, %v715
  %846 = vmatprep.subr.bf16.mxu0 %v719
  %847 = vmatpush1.bf16.msra.mxu0 %v718
  %848 = vmatprep.subr.bf16.mxu0 %v721
  %849 = vmatpush1.bf16.msra.mxu0 %v720
  %850 = vmatprep.subr.bf16.mxu0 %v723
  %851 = vmatpush1.bf16.msra.mxu0 %v722
  %852 = vmatprep.subr.bf16.mxu0 %v725
  %853 = vmatpush1.bf16.msra.mxu0 %v724
  %854 = vmatprep.subr.bf16.mxu0 %v727
  %855 = vmatpush1.bf16.msra.mxu0 %v726
  %856 = vmatprep.subr.bf16.mxu0 %v729
  %857 = vmatpush1.bf16.msra.mxu0 %v728
  %858 = vmatprep.subr.bf16.mxu0 %v731
  %859 = vmatpush1.bf16.msra.mxu0 %v730
  %860 = vmatprep.subr.bf16.mxu0 %v733
  %861 = vmatpush1.bf16.msra.mxu0 %v732
  %862 = vmatprep.subr.bf16.mxu0 %v735
  %863 = vmatpush1.bf16.msra.mxu0 %v734
  %864 = vmatprep.subr.bf16.mxu0 %v737
  %865 = vmatpush1.bf16.msra.mxu0 %v736
  %866 = vmatprep.subr.bf16.mxu0 %v739
  %867 = vmatpush1.bf16.msra.mxu0 %v738
  %868 = vmatprep.subr.bf16.mxu0 %v741
  %869 = vmatpush1.bf16.msra.mxu0 %v740
  %870 = vmatprep.subr.bf16.mxu0 %v743
  %871 = vmatpush1.bf16.msra.mxu0 %v742
  %872 = vmatprep.subr.bf16.mxu0 %v745
  %873 = vmatpush1.bf16.msra.mxu0 %v744
  %874 = vmatprep.subr.bf16.mxu0 %v747
  %875 = vmatpush1.bf16.msra.mxu0 %v746
  %876 = vmatprep.subr.bf16.mxu0 %v749
  %877 = vmatpush1.bf16.msra.mxu0 %v748
  %878 = vmatprep.mubr.bf16.mxu0 %v399
  %879 = vmatmul.mubr.bf16.gmra.mrb[0].mxu0 %v398
  %v880 = vpop.f32.mrb[0].mxu0
  %v881 = vadd.f32 %v142, %v880
  %v882 = vpop.f32.mrb[0].mxu0
  %v883 = vadd.f32 %v143, %v882
  %v884 = vpop.f32.mrb[0].mxu0
  %v885 = vadd.f32 %v144, %v884
  %v886 = vpop.f32.mrb[0].mxu0
  %v887 = vadd.f32 %v145, %v886
  %888 = vmatprep.mubr.bf16.mxu0 %v403
  %889 = vmatmul.mubr.bf16.gmra.mrb[0].mxu0 %v402
  %v890 = vpop.f32.mrb[0].mxu0
  %v891 = vadd.f32 %v146, %v890
  %v892 = vpop.f32.mrb[0].mxu0
  %v893 = vadd.f32 %v147, %v892
  %v894 = vpop.f32.mrb[0].mxu0
  %v895 = vadd.f32 %v148, %v894
  %v896 = vpop.f32.mrb[0].mxu0
  %v897 = vadd.f32 %v149, %v896
  %898 = vmatprep.mubr.bf16.mxu0 %v407
  %899 = vmatmul.mubr.bf16.gmra.mrb[0].mxu0 %v406
  %v900 = vpop.f32.mrb[0].mxu0
  %v901 = vadd.f32 %v150, %v900
  %v902 = vpop.f32.mrb[0].mxu0
  %v903 = vadd.f32 %v151, %v902
  %v904 = vpop.f32.mrb[0].mxu0
  %v905 = vadd.f32 %v152, %v904
  %v906 = vpop.f32.mrb[0].mxu0
  %v907 = vadd.f32 %v153, %v906
  %908 = vmatprep.mubr.bf16.mxu0 %v411
  %909 = vmatmul.mubr.bf16.gmra.mrb[0].mxu0 %v410
  %v910 = vpop.f32.mrb[0].mxu0
  %v911 = vadd.f32 %v154, %v910
  %v912 = vpop.f32.mrb[0].mxu0
  %v913 = vadd.f32 %v155, %v912
  %v914 = vpop.f32.mrb[0].mxu0
  %v915 = vadd.f32 %v156, %v914
  %v916 = vpop.f32.mrb[0].mxu0
  %v917 = vadd.f32 %v157, %v916
  %918 = vmatprep.mubr.bf16.mxu0 %v415
  %919 = vmatmul.mubr.bf16.gmra.mrb[0].mxu0 %v414
  %v920 = vpop.f32.mrb[0].mxu0
  %v921 = vadd.f32 %v158, %v920
  %v922 = vpop.f32.mrb[0].mxu0
  %v923 = vadd.f32 %v159, %v922
  %v924 = vpop.f32.mrb[0].mxu0
  %v925 = vadd.f32 %v160, %v924
  %v926 = vpop.f32.mrb[0].mxu0
  %v927 = vadd.f32 %v161, %v926
  %928 = vmatprep.mubr.bf16.mxu0 %v419
  %929 = vmatmul.mubr.bf16.gmra.mrb[0].mxu0 %v418
  %v930 = vpop.f32.mrb[0].mxu0
  %v931 = vadd.f32 %v162, %v930
  %v932 = vpop.f32.mrb[0].mxu0
  %v933 = vadd.f32 %v163, %v932
  %v934 = vpop.f32.mrb[0].mxu0
  %v935 = vadd.f32 %v164, %v934
  %v936 = vpop.f32.mrb[0].mxu0
  %v937 = vadd.f32 %v165, %v936
  %938 = vmatprep.mubr.bf16.mxu0 %v423
  %939 = vmatmul.mubr.bf16.gmra.mrb[0].mxu0 %v422
  %v940 = vpop.f32.mrb[0].mxu0
  %v941 = vadd.f32 %v166, %v940
  %v942 = vpop.f32.mrb[0].mxu0
  %v943 = vadd.f32 %v167, %v942
  %v944 = vpop.f32.mrb[0].mxu0
  %v945 = vadd.f32 %v168, %v944
  %v946 = vpop.f32.mrb[0].mxu0
  %v947 = vadd.f32 %v169, %v946
  %948 = vmatprep.mubr.bf16.mxu0 %v427
  %949 = vmatmul.mubr.bf16.gmra.mrb[0].mxu0 %v426
  %v950 = vpop.f32.mrb[0].mxu0
  %v951 = vadd.f32 %v170, %v950
  %v952 = vpop.f32.mrb[0].mxu0
  %v953 = vadd.f32 %v171, %v952
  %v954 = vpop.f32.mrb[0].mxu0
  %v955 = vadd.f32 %v172, %v954
  %v956 = vpop.f32.mrb[0].mxu0
  %v957 = vadd.f32 %v173, %v956
  %958 = vmatprep.mubr.bf16.mxu0 %v431
  %959 = vmatmul.mubr.bf16.gmra.mrb[0].mxu0 %v430
  %v960 = vpop.f32.mrb[0].mxu0
  %v961 = vadd.f32 %v174, %v960
  %v962 = vpop.f32.mrb[0].mxu0
  %v963 = vadd.f32 %v175, %v962
  %v964 = vpop.f32.mrb[0].mxu0
  %v965 = vadd.f32 %v176, %v964
  %v966 = vpop.f32.mrb[0].mxu0
  %v967 = vadd.f32 %v177, %v966
  %968 = vmatprep.mubr.bf16.mxu0 %v435
  %969 = vmatmul.mubr.bf16.gmra.mrb[0].mxu0 %v434
  %v970 = vpop.f32.mrb[0].mxu0
  %v971 = vadd.f32 %v178, %v970
  %v972 = vpop.f32.mrb[0].mxu0
  %v973 = vadd.f32 %v179, %v972
  %v974 = vpop.f32.mrb[0].mxu0
  %v975 = vadd.f32 %v180, %v974
  %v976 = vpop.f32.mrb[0].mxu0
  %v977 = vadd.f32 %v181, %v976
  %978 = vmatprep.mubr.bf16.mxu0 %v439
  %979 = vmatmul.mubr.bf16.gmra.mrb[0].mxu0 %v438
  %v980 = vpop.f32.mrb[0].mxu0
  %v981 = vadd.f32 %v182, %v980
  %v982 = vpop.f32.mrb[0].mxu0
  %v983 = vadd.f32 %v183, %v982
  %v984 = vpop.f32.mrb[0].mxu0
  %v985 = vadd.f32 %v184, %v984
  %v986 = vpop.f32.mrb[0].mxu0
  %v987 = vadd.f32 %v185, %v986
  %988 = vmatprep.mubr.bf16.mxu0 %v443
  %989 = vmatmul.mubr.bf16.gmra.mrb[0].mxu0 %v442
  %v990 = vpop.f32.mrb[0].mxu0
  %v991 = vadd.f32 %v186, %v990
  %v992 = vpop.f32.mrb[0].mxu0
  %v993 = vadd.f32 %v187, %v992
  %v994 = vpop.f32.mrb[0].mxu0
  %v995 = vadd.f32 %v188, %v994
  %v996 = vpop.f32.mrb[0].mxu0
  %v997 = vadd.f32 %v189, %v996
  %998 = vmatprep.mubr.bf16.mxu0 %v447
  %999 = vmatmul.mubr.bf16.gmra.mrb[0].mxu0 %v446
  %v1000 = vpop.f32.mrb[0].mxu0
  %v1001 = vadd.f32 %v190, %v1000
  %v1002 = vpop.f32.mrb[0].mxu0
  %v1003 = vadd.f32 %v191, %v1002
  %v1004 = vpop.f32.mrb[0].mxu0
  %v1005 = vadd.f32 %v192, %v1004
  %v1006 = vpop.f32.mrb[0].mxu0
  %v1007 = vadd.f32 %v193, %v1006
  %1008 = vmatprep.mubr.bf16.mxu0 %v451
  %1009 = vmatmul.mubr.bf16.gmra.mrb[0].mxu0 %v450
  %v1010 = vpop.f32.mrb[0].mxu0
  %v1011 = vadd.f32 %v194, %v1010
  %v1012 = vpop.f32.mrb[0].mxu0
  %v1013 = vadd.f32 %v195, %v1012
  %v1014 = vpop.f32.mrb[0].mxu0
  %v1015 = vadd.f32 %v196, %v1014
  %v1016 = vpop.f32.mrb[0].mxu0
  %v1017 = vadd.f32 %v197, %v1016
  %1018 = vmatprep.mubr.bf16.mxu0 %v455
  %1019 = vmatmul.mubr.bf16.gmra.mrb[0].mxu0 %v454
  %v1020 = vpop.f32.mrb[0].mxu0
  %v1021 = vadd.f32 %v198, %v1020
  %v1022 = vpop.f32.mrb[0].mxu0
  %v1023 = vadd.f32 %v199, %v1022
  %v1024 = vpop.f32.mrb[0].mxu0
  %v1025 = vadd.f32 %v200, %v1024
  %v1026 = vpop.f32.mrb[0].mxu0
  %v1027 = vadd.f32 %v201, %v1026
  %1028 = vmatprep.mubr.bf16.mxu0 %v459
  %1029 = vmatmul.mubr.bf16.gmra.mrb[0].mxu0 %v458
  %v1030 = vpop.f32.mrb[0].mxu0
  %v1031 = vadd.f32 %v202, %v1030
  %v1032 = vpop.f32.mrb[0].mxu0
  %v1033 = vadd.f32 %v203, %v1032
  %v1034 = vpop.f32.mrb[0].mxu0
  %v1035 = vadd.f32 %v204, %v1034
  %v1036 = vpop.f32.mrb[0].mxu0
  %v1037 = vadd.f32 %v205, %v1036
  %1038 = vdwg.mxu0
  %1039 = vmatprep.subr.bf16.mxu0 %v751
  %1040 = vmatpush1.bf16.msra.mxu0 %v750
  %1041 = vmatprep.subr.bf16.mxu0 %v753
  %1042 = vmatpush1.bf16.msra.mxu0 %v752
  %1043 = vmatprep.subr.bf16.mxu0 %v755
  %1044 = vmatpush1.bf16.msra.mxu0 %v754
  %1045 = vmatprep.subr.bf16.mxu0 %v757
  %1046 = vmatpush1.bf16.msra.mxu0 %v756
  %1047 = vmatprep.subr.bf16.mxu0 %v759
  %1048 = vmatpush1.bf16.msra.mxu0 %v758
  %1049 = vmatprep.subr.bf16.mxu0 %v761
  %1050 = vmatpush1.bf16.msra.mxu0 %v760
  %1051 = vmatprep.subr.bf16.mxu0 %v763
  %1052 = vmatpush1.bf16.msra.mxu0 %v762
  %1053 = vmatprep.subr.bf16.mxu0 %v765
  %1054 = vmatpush1.bf16.msra.mxu0 %v764
  %1055 = vmatprep.subr.bf16.mxu0 %v767
  %1056 = vmatpush1.bf16.msra.mxu0 %v766
  %1057 = vmatprep.subr.bf16.mxu0 %v769
  %1058 = vmatpush1.bf16.msra.mxu0 %v768
  %1059 = vmatprep.subr.bf16.mxu0 %v771
  %1060 = vmatpush1.bf16.msra.mxu0 %v770
  %1061 = vmatprep.subr.bf16.mxu0 %v773
  %1062 = vmatpush1.bf16.msra.mxu0 %v772
  %1063 = vmatprep.subr.bf16.mxu0 %v775
  %1064 = vmatpush1.bf16.msra.mxu0 %v774
  %1065 = vmatprep.subr.bf16.mxu0 %v777
  %1066 = vmatpush1.bf16.msra.mxu0 %v776
  %1067 = vmatprep.subr.bf16.mxu0 %v779
  %1068 = vmatpush1.bf16.msra.mxu0 %v778
  %1069 = vmatprep.subr.bf16.mxu0 %v781
  %1070 = vmatpush1.bf16.msra.mxu0 %v780
  %1071 = vmatprep.mubr.bf16.mxu0 %v401
  %1072 = vmatmul.mubr.bf16.gmra.mrb[0].mxu0 %v400
  %v1073 = vpop.f32.mrb[0].mxu0
  %v1074 = vadd.f32 %v881, %v1073
  %v1075 = vpop.f32.mrb[0].mxu0
  %v1076 = vadd.f32 %v883, %v1075
  %v1077 = vpop.f32.mrb[0].mxu0
  %v1078 = vadd.f32 %v885, %v1077
  %v1079 = vpop.f32.mrb[0].mxu0
  %v1080 = vadd.f32 %v887, %v1079
  %1081 = vmatprep.mubr.bf16.mxu0 %v405
  %1082 = vmatmul.mubr.bf16.gmra.mrb[0].mxu0 %v404
  %v1083 = vpop.f32.mrb[0].mxu0
  %v1084 = vadd.f32 %v891, %v1083
  %v1085 = vpop.f32.mrb[0].mxu0
  %v1086 = vadd.f32 %v893, %v1085
  %v1087 = vpop.f32.mrb[0].mxu0
  %v1088 = vadd.f32 %v895, %v1087
  %v1089 = vpop.f32.mrb[0].mxu0
  %v1090 = vadd.f32 %v897, %v1089
  %1091 = vmatprep.mubr.bf16.mxu0 %v409
  %1092 = vmatmul.mubr.bf16.gmra.mrb[0].mxu0 %v408
  %v1093 = vpop.f32.mrb[0].mxu0
  %v1094 = vadd.f32 %v901, %v1093
  %v1095 = vpop.f32.mrb[0].mxu0
  %v1096 = vadd.f32 %v903, %v1095
  %v1097 = vpop.f32.mrb[0].mxu0
  %v1098 = vadd.f32 %v905, %v1097
  %v1099 = vpop.f32.mrb[0].mxu0
  %v1100 = vadd.f32 %v907, %v1099
  %1101 = vmatprep.mubr.bf16.mxu0 %v413
  %1102 = vmatmul.mubr.bf16.gmra.mrb[0].mxu0 %v412
  %v1103 = vpop.f32.mrb[0].mxu0
  %v1104 = vadd.f32 %v911, %v1103
  %v1105 = vpop.f32.mrb[0].mxu0
  %v1106 = vadd.f32 %v913, %v1105
  %v1107 = vpop.f32.mrb[0].mxu0
  %v1108 = vadd.f32 %v915, %v1107
  %v1109 = vpop.f32.mrb[0].mxu0
  %v1110 = vadd.f32 %v917, %v1109
  %1111 = vmatprep.mubr.bf16.mxu0 %v417
  %1112 = vmatmul.mubr.bf16.gmra.mrb[0].mxu0 %v416
  %v1113 = vpop.f32.mrb[0].mxu0
  %v1114 = vadd.f32 %v921, %v1113
  %v1115 = vpop.f32.mrb[0].mxu0
  %v1116 = vadd.f32 %v923, %v1115
  %v1117 = vpop.f32.mrb[0].mxu0
  %v1118 = vadd.f32 %v925, %v1117
  %v1119 = vpop.f32.mrb[0].mxu0
  %v1120 = vadd.f32 %v927, %v1119
  %1121 = vmatprep.mubr.bf16.mxu0 %v421
  %1122 = vmatmul.mubr.bf16.gmra.mrb[0].mxu0 %v420
  %v1123 = vpop.f32.mrb[0].mxu0
  %v1124 = vadd.f32 %v931, %v1123
  %v1125 = vpop.f32.mrb[0].mxu0
  %v1126 = vadd.f32 %v933, %v1125
  %v1127 = vpop.f32.mrb[0].mxu0
  %v1128 = vadd.f32 %v935, %v1127
  %v1129 = vpop.f32.mrb[0].mxu0
  %v1130 = vadd.f32 %v937, %v1129
  %1131 = vmatprep.mubr.bf16.mxu0 %v425
  %1132 = vmatmul.mubr.bf16.gmra.mrb[0].mxu0 %v424
  %v1133 = vpop.f32.mrb[0].mxu0
  %v1134 = vadd.f32 %v941, %v1133
  %v1135 = vpop.f32.mrb[0].mxu0
  %v1136 = vadd.f32 %v943, %v1135
  %v1137 = vpop.f32.mrb[0].mxu0
  %v1138 = vadd.f32 %v945, %v1137
  %v1139 = vpop.f32.mrb[0].mxu0
  %v1140 = vadd.f32 %v947, %v1139
  %1141 = vmatprep.mubr.bf16.mxu0 %v429
  %1142 = vmatmul.mubr.bf16.gmra.mrb[0].mxu0 %v428
  %v1143 = vpop.f32.mrb[0].mxu0
  %v1144 = vadd.f32 %v951, %v1143
  %v1145 = vpop.f32.mrb[0].mxu0
  %v1146 = vadd.f32 %v953, %v1145
  %v1147 = vpop.f32.mrb[0].mxu0
  %v1148 = vadd.f32 %v955, %v1147
  %v1149 = vpop.f32.mrb[0].mxu0
  %v1150 = vadd.f32 %v957, %v1149
  %1151 = vmatprep.mubr.bf16.mxu0 %v433
  %1152 = vmatmul.mubr.bf16.gmra.mrb[0].mxu0 %v432
  %v1153 = vpop.f32.mrb[0].mxu0
  %v1154 = vadd.f32 %v961, %v1153
  %v1155 = vpop.f32.mrb[0].mxu0
  %v1156 = vadd.f32 %v963, %v1155
  %v1157 = vpop.f32.mrb[0].mxu0
  %v1158 = vadd.f32 %v965, %v1157
  %v1159 = vpop.f32.mrb[0].mxu0
  %v1160 = vadd.f32 %v967, %v1159
  %1161 = vmatprep.mubr.bf16.mxu0 %v437
  %1162 = vmatmul.mubr.bf16.gmra.mrb[0].mxu0 %v436
  %v1163 = vpop.f32.mrb[0].mxu0
  %v1164 = vadd.f32 %v971, %v1163
  %v1165 = vpop.f32.mrb[0].mxu0
  %v1166 = vadd.f32 %v973, %v1165
  %v1167 = vpop.f32.mrb[0].mxu0
  %v1168 = vadd.f32 %v975, %v1167
  %v1169 = vpop.f32.mrb[0].mxu0
  %v1170 = vadd.f32 %v977, %v1169
  %1171 = vmatprep.mubr.bf16.mxu0 %v441
  %1172 = vmatmul.mubr.bf16.gmra.mrb[0].mxu0 %v440
  %v1173 = vpop.f32.mrb[0].mxu0
  %v1174 = vadd.f32 %v981, %v1173
  %v1175 = vpop.f32.mrb[0].mxu0
  %v1176 = vadd.f32 %v983, %v1175
  %v1177 = vpop.f32.mrb[0].mxu0
  %v1178 = vadd.f32 %v985, %v1177
  %v1179 = vpop.f32.mrb[0].mxu0
  %v1180 = vadd.f32 %v987, %v1179
  %1181 = vmatprep.mubr.bf16.mxu0 %v445
  %1182 = vmatmul.mubr.bf16.gmra.mrb[0].mxu0 %v444
  %v1183 = vpop.f32.mrb[0].mxu0
  %v1184 = vadd.f32 %v991, %v1183
  %v1185 = vpop.f32.mrb[0].mxu0
  %v1186 = vadd.f32 %v993, %v1185
  %v1187 = vpop.f32.mrb[0].mxu0
  %v1188 = vadd.f32 %v995, %v1187
  %v1189 = vpop.f32.mrb[0].mxu0
  %v1190 = vadd.f32 %v997, %v1189
  %1191 = vmatprep.mubr.bf16.mxu0 %v449
  %1192 = vmatmul.mubr.bf16.gmra.mrb[0].mxu0 %v448
  %v1193 = vpop.f32.mrb[0].mxu0
  %v1194 = vadd.f32 %v1001, %v1193
  %v1195 = vpop.f32.mrb[0].mxu0
  %v1196 = vadd.f32 %v1003, %v1195
  %v1197 = vpop.f32.mrb[0].mxu0
  %v1198 = vadd.f32 %v1005, %v1197
  %v1199 = vpop.f32.mrb[0].mxu0
  %v1200 = vadd.f32 %v1007, %v1199
  %1201 = vmatprep.mubr.bf16.mxu0 %v453
  %1202 = vmatmul.mubr.bf16.gmra.mrb[0].mxu0 %v452
  %v1203 = vpop.f32.mrb[0].mxu0
  %v1204 = vadd.f32 %v1011, %v1203
  %v1205 = vpop.f32.mrb[0].mxu0
  %v1206 = vadd.f32 %v1013, %v1205
  %v1207 = vpop.f32.mrb[0].mxu0
  %v1208 = vadd.f32 %v1015, %v1207
  %v1209 = vpop.f32.mrb[0].mxu0
  %v1210 = vadd.f32 %v1017, %v1209
  %1211 = vmatprep.mubr.bf16.mxu0 %v457
  %1212 = vmatmul.mubr.bf16.gmra.mrb[0].mxu0 %v456
  %v1213 = vpop.f32.mrb[0].mxu0
  %v1214 = vadd.f32 %v1021, %v1213
  %v1215 = vpop.f32.mrb[0].mxu0
  %v1216 = vadd.f32 %v1023, %v1215
  %v1217 = vpop.f32.mrb[0].mxu0
  %v1218 = vadd.f32 %v1025, %v1217
  %v1219 = vpop.f32.mrb[0].mxu0
  %v1220 = vadd.f32 %v1027, %v1219
  %1221 = vmatprep.mubr.bf16.mxu0 %v461
  %1222 = vmatmul.mubr.bf16.gmra.mrb[0].mxu0 %v460
  %v1223 = vpop.f32.mrb[0].mxu0
  %v1224 = vadd.f32 %v1031, %v1223
  %v1225 = vpop.f32.mrb[0].mxu0
  %v1226 = vadd.f32 %v1033, %v1225
  %v1227 = vpop.f32.mrb[0].mxu0
  %v1228 = vadd.f32 %v1035, %v1227
  %v1229 = vpop.f32.mrb[0].mxu0
  %v1230 = vadd.f32 %v1037, %v1229
  %1231 = vdwg.mxu0
  %1232 = vst [vmem:[%s3] sm:$0xff] %v1074
  %1233 = vst [vmem:[%s3 + $0x8] sm:$0xff] %v1076
  %1234 = vst [vmem:[%s3 + $0x10] sm:$0xff] %v1078
  %1235 = vst [vmem:[%s3 + $0x18] sm:$0xff] %v1080
  %1236 = vst [vmem:[%s3 + $0x20] sm:$0xff] %v1084
  %1237 = vst [vmem:[%s3 + $0x28] sm:$0xff] %v1086
  %1238 = vst [vmem:[%s3 + $0x30] sm:$0xff] %v1088
  %1239 = vst [vmem:[%s3 + $0x38] sm:$0xff] %v1090
  %1240 = vst [vmem:[%s3 + $0x40] sm:$0xff] %v1094
  %1241 = vst [vmem:[%s3 + $0x48] sm:$0xff] %v1096
  %1242 = vst [vmem:[%s3 + $0x50] sm:$0xff] %v1098
  %1243 = vst [vmem:[%s3 + $0x58] sm:$0xff] %v1100
  %1244 = vst [vmem:[%s3 + $0x60] sm:$0xff] %v1104
  %1245 = vst [vmem:[%s3 + $0x68] sm:$0xff] %v1106
  %1246 = vst [vmem:[%s3 + $0x70] sm:$0xff] %v1108
  %1247 = vst [vmem:[%s3 + $0x78] sm:$0xff] %v1110
  %1248 = vst [vmem:[%s3 + $0x80] sm:$0xff] %v1114
  %1249 = vst [vmem:[%s3 + $0x88] sm:$0xff] %v1116
  %1250 = vst [vmem:[%s3 + $0x90] sm:$0xff] %v1118
  %1251 = vst [vmem:[%s3 + $0x98] sm:$0xff] %v1120
  %1252 = vst [vmem:[%s3 + $0xa0] sm:$0xff] %v1124
  %1253 = vst [vmem:[%s3 + $0xa8] sm:$0xff] %v1126
  %1254 = vst [vmem:[%s3 + $0xb0] sm:$0xff] %v1128
  %1255 = vst [vmem:[%s3 + $0xb8] sm:$0xff] %v1130
  %1256 = vst [vmem:[%s3 + $0xc0] sm:$0xff] %v1134
  %1257 = vst [vmem:[%s3 + $0xc8] sm:$0xff] %v1136
  %1258 = vst [vmem:[%s3 + $0xd0] sm:$0xff] %v1138
  %1259 = vst [vmem:[%s3 + $0xd8] sm:$0xff] %v1140
  %1260 = vst [vmem:[%s3 + $0xe0] sm:$0xff] %v1144
  %1261 = vst [vmem:[%s3 + $0xe8] sm:$0xff] %v1146
  %1262 = vst [vmem:[%s3 + $0xf0] sm:$0xff] %v1148
  %1263 = vst [vmem:[%s3 + $0xf8] sm:$0xff] %v1150
  %1264 = vst [vmem:[%s3 + $0x100] sm:$0xff] %v1154
  %1265 = vst [vmem:[%s3 + $0x108] sm:$0xff] %v1156
  %1266 = vst [vmem:[%s3 + $0x110] sm:$0xff] %v1158
  %1267 = vst [vmem:[%s3 + $0x118] sm:$0xff] %v1160
  %1268 = vst [vmem:[%s3 + $0x120] sm:$0xff] %v1164
  %1269 = vst [vmem:[%s3 + $0x128] sm:$0xff] %v1166
  %1270 = vst [vmem:[%s3 + $0x130] sm:$0xff] %v1168
  %1271 = vst [vmem:[%s3 + $0x138] sm:$0xff] %v1170
  %1272 = vst [vmem:[%s3 + $0x140] sm:$0xff] %v1174
  %1273 = vst [vmem:[%s3 + $0x148] sm:$0xff] %v1176
  %1274 = vst [vmem:[%s3 + $0x150] sm:$0xff] %v1178
  %1275 = vst [vmem:[%s3 + $0x158] sm:$0xff] %v1180
  %1276 = vst [vmem:[%s3 + $0x160] sm:$0xff] %v1184
  %1277 = vst [vmem:[%s3 + $0x168] sm:$0xff] %v1186
  %1278 = vst [vmem:[%s3 + $0x170] sm:$0xff] %v1188
  %1279 = vst [vmem:[%s3 + $0x178] sm:$0xff] %v1190
  %1280 = vst [vmem:[%s3 + $0x180] sm:$0xff] %v1194
  %1281 = vst [vmem:[%s3 + $0x188] sm:$0xff] %v1196
  %1282 = vst [vmem:[%s3 + $0x190] sm:$0xff] %v1198
  %1283 = vst [vmem:[%s3 + $0x198] sm:$0xff] %v1200
  %1284 = vst [vmem:[%s3 + $0x1a0] sm:$0xff] %v1204
  %1285 = vst [vmem:[%s3 + $0x1a8] sm:$0xff] %v1206
  %1286 = vst [vmem:[%s3 + $0x1b0] sm:$0xff] %v1208
  %1287 = vst [vmem:[%s3 + $0x1b8] sm:$0xff] %v1210
  %1288 = vst [vmem:[%s3 + $0x1c0] sm:$0xff] %v1214
  %1289 = vst [vmem:[%s3 + $0x1c8] sm:$0xff] %v1216
  %1290 = vst [vmem:[%s3 + $0x1d0] sm:$0xff] %v1218
  %1291 = vst [vmem:[%s3 + $0x1d8] sm:$0xff] %v1220
  %1292 = vst [vmem:[%s3 + $0x1e0] sm:$0xff] %v1224
  %1293 = vst [vmem:[%s3 + $0x1e8] sm:$0xff] %v1226
  %1294 = vst [vmem:[%s3 + $0x1f0] sm:$0xff] %v1228
  %1295 = vst [vmem:[%s3 + $0x1f8] sm:$0xff] %v1230
  %v1296 = vld [vmem:[%s0] sm:$0xff]
  %v1297 = vld [vmem:[%s0 + $0x8] sm:$0xff]
  %v1298 = vld [vmem:[%s0 + $0x10] sm:$0xff]
  %v1299 = vld [vmem:[%s0 + $0x18] sm:$0xff]
  %v1300 = vld [vmem:[%s0 + $0x20] sm:$0xff]
  %v1301 = vld [vmem:[%s0 + $0x28] sm:$0xff]
  %v1302 = vld [vmem:[%s0 + $0x30] sm:$0xff]
  %v1303 = vld [vmem:[%s0 + $0x38] sm:$0xff]
  %v1304 = vld [vmem:[%s0 + $0x40] sm:$0xff]
  %v1305 = vld [vmem:[%s0 + $0x48] sm:$0xff]
  %v1306 = vld [vmem:[%s0 + $0x50] sm:$0xff]
  %v1307 = vld [vmem:[%s0 + $0x58] sm:$0xff]
  %v1308 = vld [vmem:[%s0 + $0x60] sm:$0xff]
  %v1309 = vld [vmem:[%s0 + $0x68] sm:$0xff]
  %v1310 = vld [vmem:[%s0 + $0x70] sm:$0xff]
  %v1311 = vld [vmem:[%s0 + $0x78] sm:$0xff]
  %v1312 = vld [vmem:[%s0 + $0x80] sm:$0xff]
  %v1313 = vld [vmem:[%s0 + $0x88] sm:$0xff]
  %v1314 = vld [vmem:[%s0 + $0x90] sm:$0xff]
  %v1315 = vld [vmem:[%s0 + $0x98] sm:$0xff]
  %v1316 = vld [vmem:[%s0 + $0xa0] sm:$0xff]
  %v1317 = vld [vmem:[%s0 + $0xa8] sm:$0xff]
  %v1318 = vld [vmem:[%s0 + $0xb0] sm:$0xff]
  %v1319 = vld [vmem:[%s0 + $0xb8] sm:$0xff]
  %v1320 = vld [vmem:[%s0 + $0xc0] sm:$0xff]
  %v1321 = vld [vmem:[%s0 + $0xc8] sm:$0xff]
  %v1322 = vld [vmem:[%s0 + $0xd0] sm:$0xff]
  %v1323 = vld [vmem:[%s0 + $0xd8] sm:$0xff]
  %v1324 = vld [vmem:[%s0 + $0xe0] sm:$0xff]
  %v1325 = vld [vmem:[%s0 + $0xe8] sm:$0xff]
  %v1326 = vld [vmem:[%s0 + $0xf0] sm:$0xff]
  %v1327 = vld [vmem:[%s0 + $0xf8] sm:$0xff]
  %v1328 = vld [vmem:[%s0 + $0x100] sm:$0xff]
  %v1329 = vld [vmem:[%s0 + $0x108] sm:$0xff]
  %v1330 = vld [vmem:[%s0 + $0x110] sm:$0xff]
  %v1331 = vld [vmem:[%s0 + $0x118] sm:$0xff]
  %v1332 = vld [vmem:[%s0 + $0x120] sm:$0xff]
  %v1333 = vld [vmem:[%s0 + $0x128] sm:$0xff]
  %v1334 = vld [vmem:[%s0 + $0x130] sm:$0xff]
  %v1335 = vld [vmem:[%s0 + $0x138] sm:$0xff]
  %v1336 = vld [vmem:[%s0 + $0x140] sm:$0xff]
  %v1337 = vld [vmem:[%s0 + $0x148] sm:$0xff]
  %v1338 = vld [vmem:[%s0 + $0x150] sm:$0xff]
  %v1339 = vld [vmem:[%s0 + $0x158] sm:$0xff]
  %v1340 = vld [vmem:[%s0 + $0x160] sm:$0xff]
  %v1341 = vld [vmem:[%s0 + $0x168] sm:$0xff]
  %v1342 = vld [vmem:[%s0 + $0x170] sm:$0xff]
  %v1343 = vld [vmem:[%s0 + $0x178] sm:$0xff]
  %v1344 = vld [vmem:[%s0 + $0x180] sm:$0xff]
  %v1345 = vld [vmem:[%s0 + $0x188] sm:$0xff]
  %v1346 = vld [vmem:[%s0 + $0x190] sm:$0xff]
  %v1347 = vld [vmem:[%s0 + $0x198] sm:$0xff]
  %v1348 = vld [vmem:[%s0 + $0x1a0] sm:$0xff]
  %v1349 = vld [vmem:[%s0 + $0x1a8] sm:$0xff]
  %v1350 = vld [vmem:[%s0 + $0x1b0] sm:$0xff]
  %v1351 = vld [vmem:[%s0 + $0x1b8] sm:$0xff]
  %v1352 = vld [vmem:[%s0 + $0x1c0] sm:$0xff]
  %v1353 = vld [vmem:[%s0 + $0x1c8] sm:$0xff]
  %v1354 = vld [vmem:[%s0 + $0x1d0] sm:$0xff]
  %v1355 = vld [vmem:[%s0 + $0x1d8] sm:$0xff]
  %v1356 = vld [vmem:[%s0 + $0x1e0] sm:$0xff]
  %v1357 = vld [vmem:[%s0 + $0x1e8] sm:$0xff]
  %v1358 = vld [vmem:[%s0 + $0x1f0] sm:$0xff]
  %v1359 = vld [vmem:[%s0 + $0x1f8] sm:$0xff]
  %v1360 = vld [vmem:[%s1 + $0x8] sm:$0xff]
  %v1361 = vld [vmem:[%s1 + $0x18] sm:$0xff]
  %v1362 = vld [vmem:[%s1 + $0x28] sm:$0xff]
  %v1363 = vld [vmem:[%s1 + $0x38] sm:$0xff]
  %v1364 = vld [vmem:[%s1 + $0x48] sm:$0xff]
  %v1365 = vld [vmem:[%s1 + $0x58] sm:$0xff]
  %v1366 = vld [vmem:[%s1 + $0x68] sm:$0xff]
  %v1367 = vld [vmem:[%s1 + $0x78] sm:$0xff]
  %v1368 = vld [vmem:[%s1 + $0x88] sm:$0xff]
  %v1369 = vld [vmem:[%s1 + $0x98] sm:$0xff]
  %v1370 = vld [vmem:[%s1 + $0xa8] sm:$0xff]
  %v1371 = vld [vmem:[%s1 + $0xb8] sm:$0xff]
  %v1372 = vld [vmem:[%s1 + $0xc8] sm:$0xff]
  %v1373 = vld [vmem:[%s1 + $0xd8] sm:$0xff]
  %v1374 = vld [vmem:[%s1 + $0xe8] sm:$0xff]
  %v1375 = vld [vmem:[%s1 + $0xf8] sm:$0xff]
  %v1376 = vld [vmem:[%s1 + $0x108] sm:$0xff]
  %v1377 = vld [vmem:[%s1 + $0x118] sm:$0xff]
  %v1378 = vld [vmem:[%s1 + $0x128] sm:$0xff]
  %v1379 = vld [vmem:[%s1 + $0x138] sm:$0xff]
  %v1380 = vld [vmem:[%s1 + $0x148] sm:$0xff]
  %v1381 = vld [vmem:[%s1 + $0x158] sm:$0xff]
  %v1382 = vld [vmem:[%s1 + $0x168] sm:$0xff]
  %v1383 = vld [vmem:[%s1 + $0x178] sm:$0xff]
  %v1384 = vld [vmem:[%s1 + $0x188] sm:$0xff]
  %v1385 = vld [vmem:[%s1 + $0x198] sm:$0xff]
  %v1386 = vld [vmem:[%s1 + $0x1a8] sm:$0xff]
  %v1387 = vld [vmem:[%s1 + $0x1b8] sm:$0xff]
  %v1388 = vld [vmem:[%s1 + $0x1c8] sm:$0xff]
  %v1389 = vld [vmem:[%s1 + $0x1d8] sm:$0xff]
  %v1390 = vld [vmem:[%s1 + $0x1e8] sm:$0xff]
  %v1391 = vld [vmem:[%s1 + $0x1f8] sm:$0xff]
  %v1392 = vld [vmem:[%s1 + $0x208] sm:$0xff]
  %v1393 = vld [vmem:[%s1 + $0x218] sm:$0xff]
  %v1394 = vld [vmem:[%s1 + $0x228] sm:$0xff]
  %v1395 = vld [vmem:[%s1 + $0x238] sm:$0xff]
  %v1396 = vld [vmem:[%s1 + $0x248] sm:$0xff]
  %v1397 = vld [vmem:[%s1 + $0x258] sm:$0xff]
  %v1398 = vld [vmem:[%s1 + $0x268] sm:$0xff]
  %v1399 = vld [vmem:[%s1 + $0x278] sm:$0xff]
  %v1400 = vld [vmem:[%s1 + $0x288] sm:$0xff]
  %v1401 = vld [vmem:[%s1 + $0x298] sm:$0xff]
  %v1402 = vld [vmem:[%s1 + $0x2a8] sm:$0xff]
  %v1403 = vld [vmem:[%s1 + $0x2b8] sm:$0xff]
  %v1404 = vld [vmem:[%s1 + $0x2c8] sm:$0xff]
  %v1405 = vld [vmem:[%s1 + $0x2d8] sm:$0xff]
  %v1406 = vld [vmem:[%s1 + $0x2e8] sm:$0xff]
  %v1407 = vld [vmem:[%s1 + $0x2f8] sm:$0xff]
  %v1408 = vld [vmem:[%s1 + $0x308] sm:$0xff]
  %v1409 = vld [vmem:[%s1 + $0x318] sm:$0xff]
  %v1410 = vld [vmem:[%s1 + $0x328] sm:$0xff]
  %v1411 = vld [vmem:[%s1 + $0x338] sm:$0xff]
  %v1412 = vld [vmem:[%s1 + $0x348] sm:$0xff]
  %v1413 = vld [vmem:[%s1 + $0x358] sm:$0xff]
  %v1414 = vld [vmem:[%s1 + $0x368] sm:$0xff]
  %v1415 = vld [vmem:[%s1 + $0x378] sm:$0xff]
  %v1416 = vld [vmem:[%s1 + $0x388] sm:$0xff]
  %v1417 = vld [vmem:[%s1 + $0x398] sm:$0xff]
  %v1418 = vld [vmem:[%s1 + $0x3a8] sm:$0xff]
  %v1419 = vld [vmem:[%s1 + $0x3b8] sm:$0xff]
  %v1420 = vld [vmem:[%s1 + $0x3c8] sm:$0xff]
  %v1421 = vld [vmem:[%s1 + $0x3d8] sm:$0xff]
  %v1422 = vld [vmem:[%s1 + $0x3e8] sm:$0xff]
  %v1423 = vld [vmem:[%s1 + $0x3f8] sm:$0xff]
  %v1424 = vld [vmem:[%s2] sm:$0xff]
  %v1425 = vld [vmem:[%s2 + $0x8] sm:$0xff]
  %v1426 = vld [vmem:[%s2 + $0x10] sm:$0xff]
  %v1427 = vld [vmem:[%s2 + $0x18] sm:$0xff]
  %v1428 = vld [vmem:[%s2 + $0x20] sm:$0xff]
  %v1429 = vld [vmem:[%s2 + $0x28] sm:$0xff]
  %v1430 = vld [vmem:[%s2 + $0x30] sm:$0xff]
  %v1431 = vld [vmem:[%s2 + $0x38] sm:$0xff]
  %v1432 = vld [vmem:[%s2 + $0x40] sm:$0xff]
  %v1433 = vld [vmem:[%s2 + $0x48] sm:$0xff]
  %v1434 = vld [vmem:[%s2 + $0x50] sm:$0xff]
  %v1435 = vld [vmem:[%s2 + $0x58] sm:$0xff]
  %v1436 = vld [vmem:[%s2 + $0x60] sm:$0xff]
  %v1437 = vld [vmem:[%s2 + $0x68] sm:$0xff]
  %v1438 = vld [vmem:[%s2 + $0x70] sm:$0xff]
  %v1439 = vld [vmem:[%s2 + $0x78] sm:$0xff]
  %v1440 = vld [vmem:[%s2 + $0x80] sm:$0xff]
  %v1441 = vld [vmem:[%s2 + $0x88] sm:$0xff]
  %v1442 = vld [vmem:[%s2 + $0x90] sm:$0xff]
  %v1443 = vld [vmem:[%s2 + $0x98] sm:$0xff]
  %v1444 = vld [vmem:[%s2 + $0xa0] sm:$0xff]
  %v1445 = vld [vmem:[%s2 + $0xa8] sm:$0xff]
  %v1446 = vld [vmem:[%s2 + $0xb0] sm:$0xff]
  %v1447 = vld [vmem:[%s2 + $0xb8] sm:$0xff]
  %v1448 = vld [vmem:[%s2 + $0xc0] sm:$0xff]
  %v1449 = vld [vmem:[%s2 + $0xc8] sm:$0xff]
  %v1450 = vld [vmem:[%s2 + $0xd0] sm:$0xff]
  %v1451 = vld [vmem:[%s2 + $0xd8] sm:$0xff]
  %v1452 = vld [vmem:[%s2 + $0xe0] sm:$0xff]
  %v1453 = vld [vmem:[%s2 + $0xe8] sm:$0xff]
  %v1454 = vld [vmem:[%s2 + $0xf0] sm:$0xff]
  %v1455 = vld [vmem:[%s2 + $0xf8] sm:$0xff]
  %v1456 = vld [vmem:[%s2 + $0x100] sm:$0xff]
  %v1457 = vld [vmem:[%s2 + $0x108] sm:$0xff]
  %v1458 = vld [vmem:[%s2 + $0x110] sm:$0xff]
  %v1459 = vld [vmem:[%s2 + $0x118] sm:$0xff]
  %v1460 = vld [vmem:[%s2 + $0x120] sm:$0xff]
  %v1461 = vld [vmem:[%s2 + $0x128] sm:$0xff]
  %v1462 = vld [vmem:[%s2 + $0x130] sm:$0xff]
  %v1463 = vld [vmem:[%s2 + $0x138] sm:$0xff]
  %v1464 = vld [vmem:[%s2 + $0x140] sm:$0xff]
  %v1465 = vld [vmem:[%s2 + $0x148] sm:$0xff]
  %v1466 = vld [vmem:[%s2 + $0x150] sm:$0xff]
  %v1467 = vld [vmem:[%s2 + $0x158] sm:$0xff]
  %v1468 = vld [vmem:[%s2 + $0x160] sm:$0xff]
  %v1469 = vld [vmem:[%s2 + $0x168] sm:$0xff]
  %v1470 = vld [vmem:[%s2 + $0x170] sm:$0xff]
  %v1471 = vld [vmem:[%s2 + $0x178] sm:$0xff]
  %v1472 = vld [vmem:[%s2 + $0x180] sm:$0xff]
  %v1473 = vld [vmem:[%s2 + $0x188] sm:$0xff]
  %v1474 = vld [vmem:[%s2 + $0x190] sm:$0xff]
  %v1475 = vld [vmem:[%s2 + $0x198] sm:$0xff]
  %v1476 = vld [vmem:[%s2 + $0x1a0] sm:$0xff]
  %v1477 = vld [vmem:[%s2 + $0x1a8] sm:$0xff]
  %v1478 = vld [vmem:[%s2 + $0x1b0] sm:$0xff]
  %v1479 = vld [vmem:[%s2 + $0x1b8] sm:$0xff]
  %v1480 = vld [vmem:[%s2 + $0x1c0] sm:$0xff]
  %v1481 = vld [vmem:[%s2 + $0x1c8] sm:$0xff]
  %v1482 = vld [vmem:[%s2 + $0x1d0] sm:$0xff]
  %v1483 = vld [vmem:[%s2 + $0x1d8] sm:$0xff]
  %v1484 = vld [vmem:[%s2 + $0x1e0] sm:$0xff]
  %v1485 = vld [vmem:[%s2 + $0x1e8] sm:$0xff]
  %v1486 = vld [vmem:[%s2 + $0x1f0] sm:$0xff]
  %v1487 = vld [vmem:[%s2 + $0x1f8] sm:$0xff]
  %v1552 = vunpack.c.l.b16 %v1296
  %v1553 = vunpack.c.h.b16 %v1296
  %v1554 = vunpack.c.l.b16 %v1297
  %v1555 = vunpack.c.h.b16 %v1297
  %v1556 = vunpack.c.l.b16 %v1298
  %v1557 = vunpack.c.h.b16 %v1298
  %v1558 = vunpack.c.l.b16 %v1299
  %v1559 = vunpack.c.h.b16 %v1299
  %v1560 = vunpack.c.l.b16 %v1300
  %v1561 = vunpack.c.h.b16 %v1300
  %v1562 = vunpack.c.l.b16 %v1301
  %v1563 = vunpack.c.h.b16 %v1301
  %v1564 = vunpack.c.l.b16 %v1302
  %v1565 = vunpack.c.h.b16 %v1302
  %v1566 = vunpack.c.l.b16 %v1303
  %v1567 = vunpack.c.h.b16 %v1303
  %v1568 = vunpack.c.l.b16 %v1304
  %v1569 = vunpack.c.h.b16 %v1304
  %v1570 = vunpack.c.l.b16 %v1305
  %v1571 = vunpack.c.h.b16 %v1305
  %v1572 = vunpack.c.l.b16 %v1306
  %v1573 = vunpack.c.h.b16 %v1306
  %v1574 = vunpack.c.l.b16 %v1307
  %v1575 = vunpack.c.h.b16 %v1307
  %v1576 = vunpack.c.l.b16 %v1308
  %v1577 = vunpack.c.h.b16 %v1308
  %v1578 = vunpack.c.l.b16 %v1309
  %v1579 = vunpack.c.h.b16 %v1309
  %v1580 = vunpack.c.l.b16 %v1310
  %v1581 = vunpack.c.h.b16 %v1310
  %v1582 = vunpack.c.l.b16 %v1311
  %v1583 = vunpack.c.h.b16 %v1311
  %v1584 = vunpack.c.l.b16 %v1312
  %v1585 = vunpack.c.h.b16 %v1312
  %v1586 = vunpack.c.l.b16 %v1313
  %v1587 = vunpack.c.h.b16 %v1313
  %v1588 = vunpack.c.l.b16 %v1314
  %v1589 = vunpack.c.h.b16 %v1314
  %v1590 = vunpack.c.l.b16 %v1315
  %v1591 = vunpack.c.h.b16 %v1315
  %v1592 = vunpack.c.l.b16 %v1316
  %v1593 = vunpack.c.h.b16 %v1316
  %v1594 = vunpack.c.l.b16 %v1317
  %v1595 = vunpack.c.h.b16 %v1317
  %v1596 = vunpack.c.l.b16 %v1318
  %v1597 = vunpack.c.h.b16 %v1318
  %v1598 = vunpack.c.l.b16 %v1319
  %v1599 = vunpack.c.h.b16 %v1319
  %v1600 = vunpack.c.l.b16 %v1320
  %v1601 = vunpack.c.h.b16 %v1320
  %v1602 = vunpack.c.l.b16 %v1321
  %v1603 = vunpack.c.h.b16 %v1321
  %v1604 = vunpack.c.l.b16 %v1322
  %v1605 = vunpack.c.h.b16 %v1322
  %v1606 = vunpack.c.l.b16 %v1323
  %v1607 = vunpack.c.h.b16 %v1323
  %v1608 = vunpack.c.l.b16 %v1324
  %v1609 = vunpack.c.h.b16 %v1324
  %v1610 = vunpack.c.l.b16 %v1325
  %v1611 = vunpack.c.h.b16 %v1325
  %v1612 = vunpack.c.l.b16 %v1326
  %v1613 = vunpack.c.h.b16 %v1326
  %v1614 = vunpack.c.l.b16 %v1327
  %v1615 = vunpack.c.h.b16 %v1327
  %v1616 = vunpack.c.l.b16 %v1328
  %v1617 = vunpack.c.h.b16 %v1328
  %v1618 = vunpack.c.l.b16 %v1329
  %v1619 = vunpack.c.h.b16 %v1329
  %v1620 = vunpack.c.l.b16 %v1330
  %v1621 = vunpack.c.h.b16 %v1330
  %v1622 = vunpack.c.l.b16 %v1331
  %v1623 = vunpack.c.h.b16 %v1331
  %v1624 = vunpack.c.l.b16 %v1332
  %v1625 = vunpack.c.h.b16 %v1332
  %v1626 = vunpack.c.l.b16 %v1333
  %v1627 = vunpack.c.h.b16 %v1333
  %v1628 = vunpack.c.l.b16 %v1334
  %v1629 = vunpack.c.h.b16 %v1334
  %v1630 = vunpack.c.l.b16 %v1335
  %v1631 = vunpack.c.h.b16 %v1335
  %v1632 = vunpack.c.l.b16 %v1336
  %v1633 = vunpack.c.h.b16 %v1336
  %v1634 = vunpack.c.l.b16 %v1337
  %v1635 = vunpack.c.h.b16 %v1337
  %v1636 = vunpack.c.l.b16 %v1338
  %v1637 = vunpack.c.h.b16 %v1338
  %v1638 = vunpack.c.l.b16 %v1339
  %v1639 = vunpack.c.h.b16 %v1339
  %v1640 = vunpack.c.l.b16 %v1340
  %v1641 = vunpack.c.h.b16 %v1340
  %v1642 = vunpack.c.l.b16 %v1341
  %v1643 = vunpack.c.h.b16 %v1341
  %v1644 = vunpack.c.l.b16 %v1342
  %v1645 = vunpack.c.h.b16 %v1342
  %v1646 = vunpack.c.l.b16 %v1343
  %v1647 = vunpack.c.h.b16 %v1343
  %v1648 = vunpack.c.l.b16 %v1344
  %v1649 = vunpack.c.h.b16 %v1344
  %v1650 = vunpack.c.l.b16 %v1345
  %v1651 = vunpack.c.h.b16 %v1345
  %v1652 = vunpack.c.l.b16 %v1346
  %v1653 = vunpack.c.h.b16 %v1346
  %v1654 = vunpack.c.l.b16 %v1347
  %v1655 = vunpack.c.h.b16 %v1347
  %v1656 = vunpack.c.l.b16 %v1348
  %v1657 = vunpack.c.h.b16 %v1348
  %v1658 = vunpack.c.l.b16 %v1349
  %v1659 = vunpack.c.h.b16 %v1349
  %v1660 = vunpack.c.l.b16 %v1350
  %v1661 = vunpack.c.h.b16 %v1350
  %v1662 = vunpack.c.l.b16 %v1351
  %v1663 = vunpack.c.h.b16 %v1351
  %v1664 = vunpack.c.l.b16 %v1352
  %v1665 = vunpack.c.h.b16 %v1352
  %v1666 = vunpack.c.l.b16 %v1353
  %v1667 = vunpack.c.h.b16 %v1353
  %v1668 = vunpack.c.l.b16 %v1354
  %v1669 = vunpack.c.h.b16 %v1354
  %v1670 = vunpack.c.l.b16 %v1355
  %v1671 = vunpack.c.h.b16 %v1355
  %v1672 = vunpack.c.l.b16 %v1356
  %v1673 = vunpack.c.h.b16 %v1356
  %v1674 = vunpack.c.l.b16 %v1357
  %v1675 = vunpack.c.h.b16 %v1357
  %v1676 = vunpack.c.l.b16 %v1358
  %v1677 = vunpack.c.h.b16 %v1358
  %v1678 = vunpack.c.l.b16 %v1359
  %v1679 = vunpack.c.h.b16 %v1359
  %v1680 = vpack.c.b16 %v1556, %v1552
  %v1681 = vpack.c.b16 %v1557, %v1553
  %v1682 = vpack.c.b16 %v1558, %v1554
  %v1683 = vpack.c.b16 %v1559, %v1555
  %v1684 = vpack.c.b16 %v1564, %v1560
  %v1685 = vpack.c.b16 %v1565, %v1561
  %v1686 = vpack.c.b16 %v1566, %v1562
  %v1687 = vpack.c.b16 %v1567, %v1563
  %v1688 = vpack.c.b16 %v1572, %v1568
  %v1689 = vpack.c.b16 %v1573, %v1569
  %v1690 = vpack.c.b16 %v1574, %v1570
  %v1691 = vpack.c.b16 %v1575, %v1571
  %v1692 = vpack.c.b16 %v1580, %v1576
  %v1693 = vpack.c.b16 %v1581, %v1577
  %v1694 = vpack.c.b16 %v1582, %v1578
  %v1695 = vpack.c.b16 %v1583, %v1579
  %v1696 = vpack.c.b16 %v1588, %v1584
  %v1697 = vpack.c.b16 %v1589, %v1585
  %v1698 = vpack.c.b16 %v1590, %v1586
  %v1699 = vpack.c.b16 %v1591, %v1587
  %v1700 = vpack.c.b16 %v1596, %v1592
  %v1701 = vpack.c.b16 %v1597, %v1593
  %v1702 = vpack.c.b16 %v1598, %v1594
  %v1703 = vpack.c.b16 %v1599, %v1595
  %v1704 = vpack.c.b16 %v1604, %v1600
  %v1705 = vpack.c.b16 %v1605, %v1601
  %v1706 = vpack.c.b16 %v1606, %v1602
  %v1707 = vpack.c.b16 %v1607, %v1603
  %v1708 = vpack.c.b16 %v1612, %v1608
  %v1709 = vpack.c.b16 %v1613, %v1609
  %v1710 = vpack.c.b16 %v1614, %v1610
  %v1711 = vpack.c.b16 %v1615, %v1611
  %v1712 = vpack.c.b16 %v1620, %v1616
  %v1713 = vpack.c.b16 %v1621, %v1617
  %v1714 = vpack.c.b16 %v1622, %v1618
  %v1715 = vpack.c.b16 %v1623, %v1619
  %v1716 = vpack.c.b16 %v1628, %v1624
  %v1717 = vpack.c.b16 %v1629, %v1625
  %v1718 = vpack.c.b16 %v1630, %v1626
  %v1719 = vpack.c.b16 %v1631, %v1627
  %v1720 = vpack.c.b16 %v1636, %v1632
  %v1721 = vpack.c.b16 %v1637, %v1633
  %v1722 = vpack.c.b16 %v1638, %v1634
  %v1723 = vpack.c.b16 %v1639, %v1635
  %v1724 = vpack.c.b16 %v1644, %v1640
  %v1725 = vpack.c.b16 %v1645, %v1641
  %v1726 = vpack.c.b16 %v1646, %v1642
  %v1727 = vpack.c.b16 %v1647, %v1643
  %v1728 = vpack.c.b16 %v1652, %v1648
  %v1729 = vpack.c.b16 %v1653, %v1649
  %v1730 = vpack.c.b16 %v1654, %v1650
  %v1731 = vpack.c.b16 %v1655, %v1651
  %v1732 = vpack.c.b16 %v1660, %v1656
  %v1733 = vpack.c.b16 %v1661, %v1657
  %v1734 = vpack.c.b16 %v1662, %v1658
  %v1735 = vpack.c.b16 %v1663, %v1659
  %v1736 = vpack.c.b16 %v1668, %v1664
  %v1737 = vpack.c.b16 %v1669, %v1665
  %v1738 = vpack.c.b16 %v1670, %v1666
  %v1739 = vpack.c.b16 %v1671, %v1667
  %v1740 = vpack.c.b16 %v1676, %v1672
  %v1741 = vpack.c.b16 %v1677, %v1673
  %v1742 = vpack.c.b16 %v1678, %v1674
  %v1743 = vpack.c.b16 %v1679, %v1675
  %v1872 = vunpack.c.l.b16 %v1360
  %v1873 = vunpack.c.h.b16 %v1360
  %v1874 = vunpack.c.l.b16 %v1361
  %v1875 = vunpack.c.h.b16 %v1361
  %v1876 = vunpack.c.l.b16 %v1362
  %v1877 = vunpack.c.h.b16 %v1362
  %v1878 = vunpack.c.l.b16 %v1363
  %v1879 = vunpack.c.h.b16 %v1363
  %v1880 = vunpack.c.l.b16 %v1364
  %v1881 = vunpack.c.h.b16 %v1364
  %v1882 = vunpack.c.l.b16 %v1365
  %v1883 = vunpack.c.h.b16 %v1365
  %v1884 = vunpack.c.l.b16 %v1366
  %v1885 = vunpack.c.h.b16 %v1366
  %v1886 = vunpack.c.l.b16 %v1367
  %v1887 = vunpack.c.h.b16 %v1367
  %v1888 = vunpack.c.l.b16 %v1368
  %v1889 = vunpack.c.h.b16 %v1368
  %v1890 = vunpack.c.l.b16 %v1369
  %v1891 = vunpack.c.h.b16 %v1369
  %v1892 = vunpack.c.l.b16 %v1370
  %v1893 = vunpack.c.h.b16 %v1370
  %v1894 = vunpack.c.l.b16 %v1371
  %v1895 = vunpack.c.h.b16 %v1371
  %v1896 = vunpack.c.l.b16 %v1372
  %v1897 = vunpack.c.h.b16 %v1372
  %v1898 = vunpack.c.l.b16 %v1373
  %v1899 = vunpack.c.h.b16 %v1373
  %v1900 = vunpack.c.l.b16 %v1374
  %v1901 = vunpack.c.h.b16 %v1374
  %v1902 = vunpack.c.l.b16 %v1375
  %v1903 = vunpack.c.h.b16 %v1375
  %v1904 = vunpack.c.l.b16 %v1376
  %v1905 = vunpack.c.h.b16 %v1376
  %v1906 = vunpack.c.l.b16 %v1377
  %v1907 = vunpack.c.h.b16 %v1377
  %v1908 = vunpack.c.l.b16 %v1378
  %v1909 = vunpack.c.h.b16 %v1378
  %v1910 = vunpack.c.l.b16 %v1379
  %v1911 = vunpack.c.h.b16 %v1379
  %v1912 = vunpack.c.l.b16 %v1380
  %v1913 = vunpack.c.h.b16 %v1380
  %v1914 = vunpack.c.l.b16 %v1381
  %v1915 = vunpack.c.h.b16 %v1381
  %v1916 = vunpack.c.l.b16 %v1382
  %v1917 = vunpack.c.h.b16 %v1382
  %v1918 = vunpack.c.l.b16 %v1383
  %v1919 = vunpack.c.h.b16 %v1383
  %v1920 = vunpack.c.l.b16 %v1384
  %v1921 = vunpack.c.h.b16 %v1384
  %v1922 = vunpack.c.l.b16 %v1385
  %v1923 = vunpack.c.h.b16 %v1385
  %v1924 = vunpack.c.l.b16 %v1386
  %v1925 = vunpack.c.h.b16 %v1386
  %v1926 = vunpack.c.l.b16 %v1387
  %v1927 = vunpack.c.h.b16 %v1387
  %v1928 = vunpack.c.l.b16 %v1388
  %v1929 = vunpack.c.h.b16 %v1388
  %v1930 = vunpack.c.l.b16 %v1389
  %v1931 = vunpack.c.h.b16 %v1389
  %v1932 = vunpack.c.l.b16 %v1390
  %v1933 = vunpack.c.h.b16 %v1390
  %v1934 = vunpack.c.l.b16 %v1391
  %v1935 = vunpack.c.h.b16 %v1391
  %v1936 = vunpack.c.l.b16 %v1392
  %v1937 = vunpack.c.h.b16 %v1392
  %v1938 = vunpack.c.l.b16 %v1393
  %v1939 = vunpack.c.h.b16 %v1393
  %v1940 = vunpack.c.l.b16 %v1394
  %v1941 = vunpack.c.h.b16 %v1394
  %v1942 = vunpack.c.l.b16 %v1395
  %v1943 = vunpack.c.h.b16 %v1395
  %v1944 = vunpack.c.l.b16 %v1396
  %v1945 = vunpack.c.h.b16 %v1396
  %v1946 = vunpack.c.l.b16 %v1397
  %v1947 = vunpack.c.h.b16 %v1397
  %v1948 = vunpack.c.l.b16 %v1398
  %v1949 = vunpack.c.h.b16 %v1398
  %v1950 = vunpack.c.l.b16 %v1399
  %v1951 = vunpack.c.h.b16 %v1399
  %v1952 = vunpack.c.l.b16 %v1400
  %v1953 = vunpack.c.h.b16 %v1400
  %v1954 = vunpack.c.l.b16 %v1401
  %v1955 = vunpack.c.h.b16 %v1401
  %v1956 = vunpack.c.l.b16 %v1402
  %v1957 = vunpack.c.h.b16 %v1402
  %v1958 = vunpack.c.l.b16 %v1403
  %v1959 = vunpack.c.h.b16 %v1403
  %v1960 = vunpack.c.l.b16 %v1404
  %v1961 = vunpack.c.h.b16 %v1404
  %v1962 = vunpack.c.l.b16 %v1405
  %v1963 = vunpack.c.h.b16 %v1405
  %v1964 = vunpack.c.l.b16 %v1406
  %v1965 = vunpack.c.h.b16 %v1406
  %v1966 = vunpack.c.l.b16 %v1407
  %v1967 = vunpack.c.h.b16 %v1407
  %v1968 = vunpack.c.l.b16 %v1408
  %v1969 = vunpack.c.h.b16 %v1408
  %v1970 = vunpack.c.l.b16 %v1409
  %v1971 = vunpack.c.h.b16 %v1409
  %v1972 = vunpack.c.l.b16 %v1410
  %v1973 = vunpack.c.h.b16 %v1410
  %v1974 = vunpack.c.l.b16 %v1411
  %v1975 = vunpack.c.h.b16 %v1411
  %v1976 = vunpack.c.l.b16 %v1412
  %v1977 = vunpack.c.h.b16 %v1412
  %v1978 = vunpack.c.l.b16 %v1413
  %v1979 = vunpack.c.h.b16 %v1413
  %v1980 = vunpack.c.l.b16 %v1414
  %v1981 = vunpack.c.h.b16 %v1414
  %v1982 = vunpack.c.l.b16 %v1415
  %v1983 = vunpack.c.h.b16 %v1415
  %v1984 = vunpack.c.l.b16 %v1416
  %v1985 = vunpack.c.h.b16 %v1416
  %v1986 = vunpack.c.l.b16 %v1417
  %v1987 = vunpack.c.h.b16 %v1417
  %v1988 = vunpack.c.l.b16 %v1418
  %v1989 = vunpack.c.h.b16 %v1418
  %v1990 = vunpack.c.l.b16 %v1419
  %v1991 = vunpack.c.h.b16 %v1419
  %v1992 = vunpack.c.l.b16 %v1420
  %v1993 = vunpack.c.h.b16 %v1420
  %v1994 = vunpack.c.l.b16 %v1421
  %v1995 = vunpack.c.h.b16 %v1421
  %v1996 = vunpack.c.l.b16 %v1422
  %v1997 = vunpack.c.h.b16 %v1422
  %v1998 = vunpack.c.l.b16 %v1423
  %v1999 = vunpack.c.h.b16 %v1423
  %v2000 = vpack.c.b16 %v1874, %v1872
  %v2001 = vpack.c.b16 %v1875, %v1873
  %v2002 = vpack.c.b16 %v1878, %v1876
  %v2003 = vpack.c.b16 %v1879, %v1877
  %v2004 = vpack.c.b16 %v1882, %v1880
  %v2005 = vpack.c.b16 %v1883, %v1881
  %v2006 = vpack.c.b16 %v1886, %v1884
  %v2007 = vpack.c.b16 %v1887, %v1885
  %v2008 = vpack.c.b16 %v1890, %v1888
  %v2009 = vpack.c.b16 %v1891, %v1889
  %v2010 = vpack.c.b16 %v1894, %v1892
  %v2011 = vpack.c.b16 %v1895, %v1893
  %v2012 = vpack.c.b16 %v1898, %v1896
  %v2013 = vpack.c.b16 %v1899, %v1897
  %v2014 = vpack.c.b16 %v1902, %v1900
  %v2015 = vpack.c.b16 %v1903, %v1901
  %v2016 = vpack.c.b16 %v1906, %v1904
  %v2017 = vpack.c.b16 %v1907, %v1905
  %v2018 = vpack.c.b16 %v1910, %v1908
  %v2019 = vpack.c.b16 %v1911, %v1909
  %v2020 = vpack.c.b16 %v1914, %v1912
  %v2021 = vpack.c.b16 %v1915, %v1913
  %v2022 = vpack.c.b16 %v1918, %v1916
  %v2023 = vpack.c.b16 %v1919, %v1917
  %v2024 = vpack.c.b16 %v1922, %v1920
  %v2025 = vpack.c.b16 %v1923, %v1921
  %v2026 = vpack.c.b16 %v1926, %v1924
  %v2027 = vpack.c.b16 %v1927, %v1925
  %v2028 = vpack.c.b16 %v1930, %v1928
  %v2029 = vpack.c.b16 %v1931, %v1929
  %v2030 = vpack.c.b16 %v1934, %v1932
  %v2031 = vpack.c.b16 %v1935, %v1933
  %v2032 = vpack.c.b16 %v1938, %v1936
  %v2033 = vpack.c.b16 %v1939, %v1937
  %v2034 = vpack.c.b16 %v1942, %v1940
  %v2035 = vpack.c.b16 %v1943, %v1941
  %v2036 = vpack.c.b16 %v1946, %v1944
  %v2037 = vpack.c.b16 %v1947, %v1945
  %v2038 = vpack.c.b16 %v1950, %v1948
  %v2039 = vpack.c.b16 %v1951, %v1949
  %v2040 = vpack.c.b16 %v1954, %v1952
  %v2041 = vpack.c.b16 %v1955, %v1953
  %v2042 = vpack.c.b16 %v1958, %v1956
  %v2043 = vpack.c.b16 %v1959, %v1957
  %v2044 = vpack.c.b16 %v1962, %v1960
  %v2045 = vpack.c.b16 %v1963, %v1961
  %v2046 = vpack.c.b16 %v1966, %v1964
  %v2047 = vpack.c.b16 %v1967, %v1965
  %v2048 = vpack.c.b16 %v1970, %v1968
  %v2049 = vpack.c.b16 %v1971, %v1969
  %v2050 = vpack.c.b16 %v1974, %v1972
  %v2051 = vpack.c.b16 %v1975, %v1973
  %v2052 = vpack.c.b16 %v1978, %v1976
  %v2053 = vpack.c.b16 %v1979, %v1977
  %v2054 = vpack.c.b16 %v1982, %v1980
  %v2055 = vpack.c.b16 %v1983, %v1981
  %v2056 = vpack.c.b16 %v1986, %v1984
  %v2057 = vpack.c.b16 %v1987, %v1985
  %v2058 = vpack.c.b16 %v1990, %v1988
  %v2059 = vpack.c.b16 %v1991, %v1989
  %v2060 = vpack.c.b16 %v1994, %v1992
  %v2061 = vpack.c.b16 %v1995, %v1993
  %v2062 = vpack.c.b16 %v1998, %v1996
  %v2063 = vpack.c.b16 %v1999, %v1997
  %2128 = vmatprep.subr.bf16.mxu0 %v2001
  %2129 = vmatpush1.bf16.msra.mxu0 %v2000
  %2130 = vmatprep.subr.bf16.mxu0 %v2003
  %2131 = vmatpush1.bf16.msra.mxu0 %v2002
  %2132 = vmatprep.subr.bf16.mxu0 %v2005
  %2133 = vmatpush1.bf16.msra.mxu0 %v2004
  %2134 = vmatprep.subr.bf16.mxu0 %v2007
  %2135 = vmatpush1.bf16.msra.mxu0 %v2006
  %2136 = vmatprep.subr.bf16.mxu0 %v2009
  %2137 = vmatpush1.bf16.msra.mxu0 %v2008
  %2138 = vmatprep.subr.bf16.mxu0 %v2011
  %2139 = vmatpush1.bf16.msra.mxu0 %v2010
  %2140 = vmatprep.subr.bf16.mxu0 %v2013
  %2141 = vmatpush1.bf16.msra.mxu0 %v2012
  %2142 = vmatprep.subr.bf16.mxu0 %v2015
  %2143 = vmatpush1.bf16.msra.mxu0 %v2014
  %2144 = vmatprep.subr.bf16.mxu0 %v2017
  %2145 = vmatpush1.bf16.msra.mxu0 %v2016
  %2146 = vmatprep.subr.bf16.mxu0 %v2019
  %2147 = vmatpush1.bf16.msra.mxu0 %v2018
  %2148 = vmatprep.subr.bf16.mxu0 %v2021
  %2149 = vmatpush1.bf16.msra.mxu0 %v2020
  %2150 = vmatprep.subr.bf16.mxu0 %v2023
  %2151 = vmatpush1.bf16.msra.mxu0 %v2022
  %2152 = vmatprep.subr.bf16.mxu0 %v2025
  %2153 = vmatpush1.bf16.msra.mxu0 %v2024
  %2154 = vmatprep.subr.bf16.mxu0 %v2027
  %2155 = vmatpush1.bf16.msra.mxu0 %v2026
  %2156 = vmatprep.subr.bf16.mxu0 %v2029
  %2157 = vmatpush1.bf16.msra.mxu0 %v2028
  %2158 = vmatprep.subr.bf16.mxu0 %v2031
  %2159 = vmatpush1.bf16.msra.mxu0 %v2030
  %2160 = vmatprep.mubr.bf16.mxu0 %v1681
  %2161 = vmatmul.mubr.bf16.gmra.mrb[0].mxu0 %v1680
  %v2162 = vpop.f32.mrb[0].mxu0
  %v2163 = vadd.f32 %v1424, %v2162
  %v2164 = vpop.f32.mrb[0].mxu0
  %v2165 = vadd.f32 %v1425, %v2164
  %v2166 = vpop.f32.mrb[0].mxu0
  %v2167 = vadd.f32 %v1426, %v2166
  %v2168 = vpop.f32.mrb[0].mxu0
  %v2169 = vadd.f32 %v1427, %v2168
  %2170 = vmatprep.mubr.bf16.mxu0 %v1685
  %2171 = vmatmul.mubr.bf16.gmra.mrb[0].mxu0 %v1684
  %v2172 = vpop.f32.mrb[0].mxu0
  %v2173 = vadd.f32 %v1428, %v2172
  %v2174 = vpop.f32.mrb[0].mxu0
  %v2175 = vadd.f32 %v1429, %v2174
  %v2176 = vpop.f32.mrb[0].mxu0
  %v2177 = vadd.f32 %v1430, %v2176
  %v2178 = vpop.f32.mrb[0].mxu0
  %v2179 = vadd.f32 %v1431, %v2178
  %2180 = vmatprep.mubr.bf16.mxu0 %v1689
  %2181 = vmatmul.mubr.bf16.gmra.mrb[0].mxu0 %v1688
  %v2182 = vpop.f32.mrb[0].mxu0
  %v2183 = vadd.f32 %v1432, %v2182
  %v2184 = vpop.f32.mrb[0].mxu0
  %v2185 = vadd.f32 %v1433, %v2184
  %v2186 = vpop.f32.mrb[0].mxu0
  %v2187 = vadd.f32 %v1434, %v2186
  %v2188 = vpop.f32.mrb[0].mxu0
  %v2189 = vadd.f32 %v1435, %v2188
  %2190 = vmatprep.mubr.bf16.mxu0 %v1693
  %2191 = vmatmul.mubr.bf16.gmra.mrb[0].mxu0 %v1692
  %v2192 = vpop.f32.mrb[0].mxu0
  %v2193 = vadd.f32 %v1436, %v2192
  %v2194 = vpop.f32.mrb[0].mxu0
  %v2195 = vadd.f32 %v1437, %v2194
  %v2196 = vpop.f32.mrb[0].mxu0
  %v2197 = vadd.f32 %v1438, %v2196
  %v2198 = vpop.f32.mrb[0].mxu0
  %v2199 = vadd.f32 %v1439, %v2198
  %2200 = vmatprep.mubr.bf16.mxu0 %v1697
  %2201 = vmatmul.mubr.bf16.gmra.mrb[0].mxu0 %v1696
  %v2202 = vpop.f32.mrb[0].mxu0
  %v2203 = vadd.f32 %v1440, %v2202
  %v2204 = vpop.f32.mrb[0].mxu0
  %v2205 = vadd.f32 %v1441, %v2204
  %v2206 = vpop.f32.mrb[0].mxu0
  %v2207 = vadd.f32 %v1442, %v2206
  %v2208 = vpop.f32.mrb[0].mxu0
  %v2209 = vadd.f32 %v1443, %v2208
  %2210 = vmatprep.mubr.bf16.mxu0 %v1701
  %2211 = vmatmul.mubr.bf16.gmra.mrb[0].mxu0 %v1700
  %v2212 = vpop.f32.mrb[0].mxu0
  %v2213 = vadd.f32 %v1444, %v2212
  %v2214 = vpop.f32.mrb[0].mxu0
  %v2215 = vadd.f32 %v1445, %v2214
  %v2216 = vpop.f32.mrb[0].mxu0
  %v2217 = vadd.f32 %v1446, %v2216
  %v2218 = vpop.f32.mrb[0].mxu0
  %v2219 = vadd.f32 %v1447, %v2218
  %2220 = vmatprep.mubr.bf16.mxu0 %v1705
  %2221 = vmatmul.mubr.bf16.gmra.mrb[0].mxu0 %v1704
  %v2222 = vpop.f32.mrb[0].mxu0
  %v2223 = vadd.f32 %v1448, %v2222
  %v2224 = vpop.f32.mrb[0].mxu0
  %v2225 = vadd.f32 %v1449, %v2224
  %v2226 = vpop.f32.mrb[0].mxu0
  %v2227 = vadd.f32 %v1450, %v2226
  %v2228 = vpop.f32.mrb[0].mxu0
  %v2229 = vadd.f32 %v1451, %v2228
  %2230 = vmatprep.mubr.bf16.mxu0 %v1709
  %2231 = vmatmul.mubr.bf16.gmra.mrb[0].mxu0 %v1708
  %v2232 = vpop.f32.mrb[0].mxu0
  %v2233 = vadd.f32 %v1452, %v2232
  %v2234 = vpop.f32.mrb[0].mxu0
  %v2235 = vadd.f32 %v1453, %v2234
  %v2236 = vpop.f32.mrb[0].mxu0
  %v2237 = vadd.f32 %v1454, %v2236
  %v2238 = vpop.f32.mrb[0].mxu0
  %v2239 = vadd.f32 %v1455, %v2238
  %2240 = vmatprep.mubr.bf16.mxu0 %v1713
  %2241 = vmatmul.mubr.bf16.gmra.mrb[0].mxu0 %v1712
  %v2242 = vpop.f32.mrb[0].mxu0
  %v2243 = vadd.f32 %v1456, %v2242
  %v2244 = vpop.f32.mrb[0].mxu0
  %v2245 = vadd.f32 %v1457, %v2244
  %v2246 = vpop.f32.mrb[0].mxu0
  %v2247 = vadd.f32 %v1458, %v2246
  %v2248 = vpop.f32.mrb[0].mxu0
  %v2249 = vadd.f32 %v1459, %v2248
  %2250 = vmatprep.mubr.bf16.mxu0 %v1717
  %2251 = vmatmul.mubr.bf16.gmra.mrb[0].mxu0 %v1716
  %v2252 = vpop.f32.mrb[0].mxu0
  %v2253 = vadd.f32 %v1460, %v2252
  %v2254 = vpop.f32.mrb[0].mxu0
  %v2255 = vadd.f32 %v1461, %v2254
  %v2256 = vpop.f32.mrb[0].mxu0
  %v2257 = vadd.f32 %v1462, %v2256
  %v2258 = vpop.f32.mrb[0].mxu0
  %v2259 = vadd.f32 %v1463, %v2258
  %2260 = vmatprep.mubr.bf16.mxu0 %v1721
  %2261 = vmatmul.mubr.bf16.gmra.mrb[0].mxu0 %v1720
  %v2262 = vpop.f32.mrb[0].mxu0
  %v2263 = vadd.f32 %v1464, %v2262
  %v2264 = vpop.f32.mrb[0].mxu0
  %v2265 = vadd.f32 %v1465, %v2264
  %v2266 = vpop.f32.mrb[0].mxu0
  %v2267 = vadd.f32 %v1466, %v2266
  %v2268 = vpop.f32.mrb[0].mxu0
  %v2269 = vadd.f32 %v1467, %v2268
  %2270 = vmatprep.mubr.bf16.mxu0 %v1725
  %2271 = vmatmul.mubr.bf16.gmra.mrb[0].mxu0 %v1724
  %v2272 = vpop.f32.mrb[0].mxu0
  %v2273 = vadd.f32 %v1468, %v2272
  %v2274 = vpop.f32.mrb[0].mxu0
  %v2275 = vadd.f32 %v1469, %v2274
  %v2276 = vpop.f32.mrb[0].mxu0
  %v2277 = vadd.f32 %v1470, %v2276
  %v2278 = vpop.f32.mrb[0].mxu0
  %v2279 = vadd.f32 %v1471, %v2278
  %2280 = vmatprep.mubr.bf16.mxu0 %v1729
  %2281 = vmatmul.mubr.bf16.gmra.mrb[0].mxu0 %v1728
  %v2282 = vpop.f32.mrb[0].mxu0
  %v2283 = vadd.f32 %v1472, %v2282
  %v2284 = vpop.f32.mrb[0].mxu0
  %v2285 = vadd.f32 %v1473, %v2284
  %v2286 = vpop.f32.mrb[0].mxu0
  %v2287 = vadd.f32 %v1474, %v2286
  %v2288 = vpop.f32.mrb[0].mxu0
  %v2289 = vadd.f32 %v1475, %v2288
  %2290 = vmatprep.mubr.bf16.mxu0 %v1733
  %2291 = vmatmul.mubr.bf16.gmra.mrb[0].mxu0 %v1732
  %v2292 = vpop.f32.mrb[0].mxu0
  %v2293 = vadd.f32 %v1476, %v2292
  %v2294 = vpop.f32.mrb[0].mxu0
  %v2295 = vadd.f32 %v1477, %v2294
  %v2296 = vpop.f32.mrb[0].mxu0
  %v2297 = vadd.f32 %v1478, %v2296
  %v2298 = vpop.f32.mrb[0].mxu0
  %v2299 = vadd.f32 %v1479, %v2298
  %2300 = vmatprep.mubr.bf16.mxu0 %v1737
  %2301 = vmatmul.mubr.bf16.gmra.mrb[0].mxu0 %v1736
  %v2302 = vpop.f32.mrb[0].mxu0
  %v2303 = vadd.f32 %v1480, %v2302
  %v2304 = vpop.f32.mrb[0].mxu0
  %v2305 = vadd.f32 %v1481, %v2304
  %v2306 = vpop.f32.mrb[0].mxu0
  %v2307 = vadd.f32 %v1482, %v2306
  %v2308 = vpop.f32.mrb[0].mxu0
  %v2309 = vadd.f32 %v1483, %v2308
  %2310 = vmatprep.mubr.bf16.mxu0 %v1741
  %2311 = vmatmul.mubr.bf16.gmra.mrb[0].mxu0 %v1740
  %v2312 = vpop.f32.mrb[0].mxu0
  %v2313 = vadd.f32 %v1484, %v2312
  %v2314 = vpop.f32.mrb[0].mxu0
  %v2315 = vadd.f32 %v1485, %v2314
  %v2316 = vpop.f32.mrb[0].mxu0
  %v2317 = vadd.f32 %v1486, %v2316
  %v2318 = vpop.f32.mrb[0].mxu0
  %v2319 = vadd.f32 %v1487, %v2318
  %2320 = vdwg.mxu0
  %2321 = vmatprep.subr.bf16.mxu0 %v2033
  %2322 = vmatpush1.bf16.msra.mxu0 %v2032
  %2323 = vmatprep.subr.bf16.mxu0 %v2035
  %2324 = vmatpush1.bf16.msra.mxu0 %v2034
  %2325 = vmatprep.subr.bf16.mxu0 %v2037
  %2326 = vmatpush1.bf16.msra.mxu0 %v2036
  %2327 = vmatprep.subr.bf16.mxu0 %v2039
  %2328 = vmatpush1.bf16.msra.mxu0 %v2038
  %2329 = vmatprep.subr.bf16.mxu0 %v2041
  %2330 = vmatpush1.bf16.msra.mxu0 %v2040
  %2331 = vmatprep.subr.bf16.mxu0 %v2043
  %2332 = vmatpush1.bf16.msra.mxu0 %v2042
  %2333 = vmatprep.subr.bf16.mxu0 %v2045
  %2334 = vmatpush1.bf16.msra.mxu0 %v2044
  %2335 = vmatprep.subr.bf16.mxu0 %v2047
  %2336 = vmatpush1.bf16.msra.mxu0 %v2046
  %2337 = vmatprep.subr.bf16.mxu0 %v2049
  %2338 = vmatpush1.bf16.msra.mxu0 %v2048
  %2339 = vmatprep.subr.bf16.mxu0 %v2051
  %2340 = vmatpush1.bf16.msra.mxu0 %v2050
  %2341 = vmatprep.subr.bf16.mxu0 %v2053
  %2342 = vmatpush1.bf16.msra.mxu0 %v2052
  %2343 = vmatprep.subr.bf16.mxu0 %v2055
  %2344 = vmatpush1.bf16.msra.mxu0 %v2054
  %2345 = vmatprep.subr.bf16.mxu0 %v2057
  %2346 = vmatpush1.bf16.msra.mxu0 %v2056
  %2347 = vmatprep.subr.bf16.mxu0 %v2059
  %2348 = vmatpush1.bf16.msra.mxu0 %v2058
  %2349 = vmatprep.subr.bf16.mxu0 %v2061
  %2350 = vmatpush1.bf16.msra.mxu0 %v2060
  %2351 = vmatprep.subr.bf16.mxu0 %v2063
  %2352 = vmatpush1.bf16.msra.mxu0 %v2062
  %2353 = vmatprep.mubr.bf16.mxu0 %v1683
  %2354 = vmatmul.mubr.bf16.gmra.mrb[0].mxu0 %v1682
  %v2355 = vpop.f32.mrb[0].mxu0
  %v2356 = vadd.f32 %v2163, %v2355
  %v2357 = vpop.f32.mrb[0].mxu0
  %v2358 = vadd.f32 %v2165, %v2357
  %v2359 = vpop.f32.mrb[0].mxu0
  %v2360 = vadd.f32 %v2167, %v2359
  %v2361 = vpop.f32.mrb[0].mxu0
  %v2362 = vadd.f32 %v2169, %v2361
  %2363 = vmatprep.mubr.bf16.mxu0 %v1687
  %2364 = vmatmul.mubr.bf16.gmra.mrb[0].mxu0 %v1686
  %v2365 = vpop.f32.mrb[0].mxu0
  %v2366 = vadd.f32 %v2173, %v2365
  %v2367 = vpop.f32.mrb[0].mxu0
  %v2368 = vadd.f32 %v2175, %v2367
  %v2369 = vpop.f32.mrb[0].mxu0
  %v2370 = vadd.f32 %v2177, %v2369
  %v2371 = vpop.f32.mrb[0].mxu0
  %v2372 = vadd.f32 %v2179, %v2371
  %2373 = vmatprep.mubr.bf16.mxu0 %v1691
  %2374 = vmatmul.mubr.bf16.gmra.mrb[0].mxu0 %v1690
  %v2375 = vpop.f32.mrb[0].mxu0
  %v2376 = vadd.f32 %v2183, %v2375
  %v2377 = vpop.f32.mrb[0].mxu0
  %v2378 = vadd.f32 %v2185, %v2377
  %v2379 = vpop.f32.mrb[0].mxu0
  %v2380 = vadd.f32 %v2187, %v2379
  %v2381 = vpop.f32.mrb[0].mxu0
  %v2382 = vadd.f32 %v2189, %v2381
  %2383 = vmatprep.mubr.bf16.mxu0 %v1695
  %2384 = vmatmul.mubr.bf16.gmra.mrb[0].mxu0 %v1694
  %v2385 = vpop.f32.mrb[0].mxu0
  %v2386 = vadd.f32 %v2193, %v2385
  %v2387 = vpop.f32.mrb[0].mxu0
  %v2388 = vadd.f32 %v2195, %v2387
  %v2389 = vpop.f32.mrb[0].mxu0
  %v2390 = vadd.f32 %v2197, %v2389
  %v2391 = vpop.f32.mrb[0].mxu0
  %v2392 = vadd.f32 %v2199, %v2391
  %2393 = vmatprep.mubr.bf16.mxu0 %v1699
  %2394 = vmatmul.mubr.bf16.gmra.mrb[0].mxu0 %v1698
  %v2395 = vpop.f32.mrb[0].mxu0
  %v2396 = vadd.f32 %v2203, %v2395
  %v2397 = vpop.f32.mrb[0].mxu0
  %v2398 = vadd.f32 %v2205, %v2397
  %v2399 = vpop.f32.mrb[0].mxu0
  %v2400 = vadd.f32 %v2207, %v2399
  %v2401 = vpop.f32.mrb[0].mxu0
  %v2402 = vadd.f32 %v2209, %v2401
  %2403 = vmatprep.mubr.bf16.mxu0 %v1703
  %2404 = vmatmul.mubr.bf16.gmra.mrb[0].mxu0 %v1702
  %v2405 = vpop.f32.mrb[0].mxu0
  %v2406 = vadd.f32 %v2213, %v2405
  %v2407 = vpop.f32.mrb[0].mxu0
  %v2408 = vadd.f32 %v2215, %v2407
  %v2409 = vpop.f32.mrb[0].mxu0
  %v2410 = vadd.f32 %v2217, %v2409
  %v2411 = vpop.f32.mrb[0].mxu0
  %v2412 = vadd.f32 %v2219, %v2411
  %2413 = vmatprep.mubr.bf16.mxu0 %v1707
  %2414 = vmatmul.mubr.bf16.gmra.mrb[0].mxu0 %v1706
  %v2415 = vpop.f32.mrb[0].mxu0
  %v2416 = vadd.f32 %v2223, %v2415
  %v2417 = vpop.f32.mrb[0].mxu0
  %v2418 = vadd.f32 %v2225, %v2417
  %v2419 = vpop.f32.mrb[0].mxu0
  %v2420 = vadd.f32 %v2227, %v2419
  %v2421 = vpop.f32.mrb[0].mxu0
  %v2422 = vadd.f32 %v2229, %v2421
  %2423 = vmatprep.mubr.bf16.mxu0 %v1711
  %2424 = vmatmul.mubr.bf16.gmra.mrb[0].mxu0 %v1710
  %v2425 = vpop.f32.mrb[0].mxu0
  %v2426 = vadd.f32 %v2233, %v2425
  %v2427 = vpop.f32.mrb[0].mxu0
  %v2428 = vadd.f32 %v2235, %v2427
  %v2429 = vpop.f32.mrb[0].mxu0
  %v2430 = vadd.f32 %v2237, %v2429
  %v2431 = vpop.f32.mrb[0].mxu0
  %v2432 = vadd.f32 %v2239, %v2431
  %2433 = vmatprep.mubr.bf16.mxu0 %v1715
  %2434 = vmatmul.mubr.bf16.gmra.mrb[0].mxu0 %v1714
  %v2435 = vpop.f32.mrb[0].mxu0
  %v2436 = vadd.f32 %v2243, %v2435
  %v2437 = vpop.f32.mrb[0].mxu0
  %v2438 = vadd.f32 %v2245, %v2437
  %v2439 = vpop.f32.mrb[0].mxu0
  %v2440 = vadd.f32 %v2247, %v2439
  %v2441 = vpop.f32.mrb[0].mxu0
  %v2442 = vadd.f32 %v2249, %v2441
  %2443 = vmatprep.mubr.bf16.mxu0 %v1719
  %2444 = vmatmul.mubr.bf16.gmra.mrb[0].mxu0 %v1718
  %v2445 = vpop.f32.mrb[0].mxu0
  %v2446 = vadd.f32 %v2253, %v2445
  %v2447 = vpop.f32.mrb[0].mxu0
  %v2448 = vadd.f32 %v2255, %v2447
  %v2449 = vpop.f32.mrb[0].mxu0
  %v2450 = vadd.f32 %v2257, %v2449
  %v2451 = vpop.f32.mrb[0].mxu0
  %v2452 = vadd.f32 %v2259, %v2451
  %2453 = vmatprep.mubr.bf16.mxu0 %v1723
  %2454 = vmatmul.mubr.bf16.gmra.mrb[0].mxu0 %v1722
  %v2455 = vpop.f32.mrb[0].mxu0
  %v2456 = vadd.f32 %v2263, %v2455
  %v2457 = vpop.f32.mrb[0].mxu0
  %v2458 = vadd.f32 %v2265, %v2457
  %v2459 = vpop.f32.mrb[0].mxu0
  %v2460 = vadd.f32 %v2267, %v2459
  %v2461 = vpop.f32.mrb[0].mxu0
  %v2462 = vadd.f32 %v2269, %v2461
  %2463 = vmatprep.mubr.bf16.mxu0 %v1727
  %2464 = vmatmul.mubr.bf16.gmra.mrb[0].mxu0 %v1726
  %v2465 = vpop.f32.mrb[0].mxu0
  %v2466 = vadd.f32 %v2273, %v2465
  %v2467 = vpop.f32.mrb[0].mxu0
  %v2468 = vadd.f32 %v2275, %v2467
  %v2469 = vpop.f32.mrb[0].mxu0
  %v2470 = vadd.f32 %v2277, %v2469
  %v2471 = vpop.f32.mrb[0].mxu0
  %v2472 = vadd.f32 %v2279, %v2471
  %2473 = vmatprep.mubr.bf16.mxu0 %v1731
  %2474 = vmatmul.mubr.bf16.gmra.mrb[0].mxu0 %v1730
  %v2475 = vpop.f32.mrb[0].mxu0
  %v2476 = vadd.f32 %v2283, %v2475
  %v2477 = vpop.f32.mrb[0].mxu0
  %v2478 = vadd.f32 %v2285, %v2477
  %v2479 = vpop.f32.mrb[0].mxu0
  %v2480 = vadd.f32 %v2287, %v2479
  %v2481 = vpop.f32.mrb[0].mxu0
  %v2482 = vadd.f32 %v2289, %v2481
  %2483 = vmatprep.mubr.bf16.mxu0 %v1735
  %2484 = vmatmul.mubr.bf16.gmra.mrb[0].mxu0 %v1734
  %v2485 = vpop.f32.mrb[0].mxu0
  %v2486 = vadd.f32 %v2293, %v2485
  %v2487 = vpop.f32.mrb[0].mxu0
  %v2488 = vadd.f32 %v2295, %v2487
  %v2489 = vpop.f32.mrb[0].mxu0
  %v2490 = vadd.f32 %v2297, %v2489
  %v2491 = vpop.f32.mrb[0].mxu0
  %v2492 = vadd.f32 %v2299, %v2491
  %2493 = vmatprep.mubr.bf16.mxu0 %v1739
  %2494 = vmatmul.mubr.bf16.gmra.mrb[0].mxu0 %v1738
  %v2495 = vpop.f32.mrb[0].mxu0
  %v2496 = vadd.f32 %v2303, %v2495
  %v2497 = vpop.f32.mrb[0].mxu0
  %v2498 = vadd.f32 %v2305, %v2497
  %v2499 = vpop.f32.mrb[0].mxu0
  %v2500 = vadd.f32 %v2307, %v2499
  %v2501 = vpop.f32.mrb[0].mxu0
  %v2502 = vadd.f32 %v2309, %v2501
  %2503 = vmatprep.mubr.bf16.mxu0 %v1743
  %2504 = vmatmul.mubr.bf16.gmra.mrb[0].mxu0 %v1742
  %v2505 = vpop.f32.mrb[0].mxu0
  %v2506 = vadd.f32 %v2313, %v2505
  %v2507 = vpop.f32.mrb[0].mxu0
  %v2508 = vadd.f32 %v2315, %v2507
  %v2509 = vpop.f32.mrb[0].mxu0
  %v2510 = vadd.f32 %v2317, %v2509
  %v2511 = vpop.f32.mrb[0].mxu0
  %v2512 = vadd.f32 %v2319, %v2511
  %2513 = vdwg.mxu0
  %s2514 = scalar_lea.vmem %s3, 512
  %2515 = vst [vmem:[%s2514] sm:$0xff] %v2356
  %2516 = vst [vmem:[%s2514 + $0x8] sm:$0xff] %v2358
  %2517 = vst [vmem:[%s2514 + $0x10] sm:$0xff] %v2360
  %2518 = vst [vmem:[%s2514 + $0x18] sm:$0xff] %v2362
  %2519 = vst [vmem:[%s2514 + $0x20] sm:$0xff] %v2366
  %2520 = vst [vmem:[%s2514 + $0x28] sm:$0xff] %v2368
  %2521 = vst [vmem:[%s2514 + $0x30] sm:$0xff] %v2370
  %2522 = vst [vmem:[%s2514 + $0x38] sm:$0xff] %v2372
  %2523 = vst [vmem:[%s2514 + $0x40] sm:$0xff] %v2376
  %2524 = vst [vmem:[%s2514 + $0x48] sm:$0xff] %v2378
  %2525 = vst [vmem:[%s2514 + $0x50] sm:$0xff] %v2380
  %2526 = vst [vmem:[%s2514 + $0x58] sm:$0xff] %v2382
  %2527 = vst [vmem:[%s2514 + $0x60] sm:$0xff] %v2386
  %2528 = vst [vmem:[%s2514 + $0x68] sm:$0xff] %v2388
  %2529 = vst [vmem:[%s2514 + $0x70] sm:$0xff] %v2390
  %2530 = vst [vmem:[%s2514 + $0x78] sm:$0xff] %v2392
  %2531 = vst [vmem:[%s2514 + $0x80] sm:$0xff] %v2396
  %2532 = vst [vmem:[%s2514 + $0x88] sm:$0xff] %v2398
  %2533 = vst [vmem:[%s2514 + $0x90] sm:$0xff] %v2400
  %2534 = vst [vmem:[%s2514 + $0x98] sm:$0xff] %v2402
  %2535 = vst [vmem:[%s2514 + $0xa0] sm:$0xff] %v2406
  %2536 = vst [vmem:[%s2514 + $0xa8] sm:$0xff] %v2408
  %2537 = vst [vmem:[%s2514 + $0xb0] sm:$0xff] %v2410
  %2538 = vst [vmem:[%s2514 + $0xb8] sm:$0xff] %v2412
  %2539 = vst [vmem:[%s2514 + $0xc0] sm:$0xff] %v2416
  %2540 = vst [vmem:[%s2514 + $0xc8] sm:$0xff] %v2418
  %2541 = vst [vmem:[%s2514 + $0xd0] sm:$0xff] %v2420
  %2542 = vst [vmem:[%s2514 + $0xd8] sm:$0xff] %v2422
  %2543 = vst [vmem:[%s2514 + $0xe0] sm:$0xff] %v2426
  %2544 = vst [vmem:[%s2514 + $0xe8] sm:$0xff] %v2428
  %2545 = vst [vmem:[%s2514 + $0xf0] sm:$0xff] %v2430
  %2546 = vst [vmem:[%s2514 + $0xf8] sm:$0xff] %v2432
  %2547 = vst [vmem:[%s2514 + $0x100] sm:$0xff] %v2436
  %2548 = vst [vmem:[%s2514 + $0x108] sm:$0xff] %v2438
  %2549 = vst [vmem:[%s2514 + $0x110] sm:$0xff] %v2440
  %2550 = vst [vmem:[%s2514 + $0x118] sm:$0xff] %v2442
  %2551 = vst [vmem:[%s2514 + $0x120] sm:$0xff] %v2446
  %2552 = vst [vmem:[%s2514 + $0x128] sm:$0xff] %v2448
  %2553 = vst [vmem:[%s2514 + $0x130] sm:$0xff] %v2450
  %2554 = vst [vmem:[%s2514 + $0x138] sm:$0xff] %v2452
  %2555 = vst [vmem:[%s2514 + $0x140] sm:$0xff] %v2456
  %2556 = vst [vmem:[%s2514 + $0x148] sm:$0xff] %v2458
  %2557 = vst [vmem:[%s2514 + $0x150] sm:$0xff] %v2460
  %2558 = vst [vmem:[%s2514 + $0x158] sm:$0xff] %v2462
  %2559 = vst [vmem:[%s2514 + $0x160] sm:$0xff] %v2466
  %2560 = vst [vmem:[%s2514 + $0x168] sm:$0xff] %v2468
  %2561 = vst [vmem:[%s2514 + $0x170] sm:$0xff] %v2470
  %2562 = vst [vmem:[%s2514 + $0x178] sm:$0xff] %v2472
  %2563 = vst [vmem:[%s2514 + $0x180] sm:$0xff] %v2476
  %2564 = vst [vmem:[%s2514 + $0x188] sm:$0xff] %v2478
  %2565 = vst [vmem:[%s2514 + $0x190] sm:$0xff] %v2480
  %2566 = vst [vmem:[%s2514 + $0x198] sm:$0xff] %v2482
  %2567 = vst [vmem:[%s2514 + $0x1a0] sm:$0xff] %v2486
  %2568 = vst [vmem:[%s2514 + $0x1a8] sm:$0xff] %v2488
  %2569 = vst [vmem:[%s2514 + $0x1b0] sm:$0xff] %v2490
  %2570 = vst [vmem:[%s2514 + $0x1b8] sm:$0xff] %v2492
  %2571 = vst [vmem:[%s2514 + $0x1c0] sm:$0xff] %v2496
  %2572 = vst [vmem:[%s2514 + $0x1c8] sm:$0xff] %v2498
  %2573 = vst [vmem:[%s2514 + $0x1d0] sm:$0xff] %v2500
  %2574 = vst [vmem:[%s2514 + $0x1d8] sm:$0xff] %v2502
  %2575 = vst [vmem:[%s2514 + $0x1e0] sm:$0xff] %v2506
  %2576 = vst [vmem:[%s2514 + $0x1e8] sm:$0xff] %v2508
  %2577 = vst [vmem:[%s2514 + $0x1f0] sm:$0xff] %v2510
  %2578 = vst [vmem:[%s2514 + $0x1f8] sm:$0xff] %v2512
  // Predicated region
  $region14: #{embed_with_positional_bias.1} parent=0 // pred_check
    _
  $region15: #{embed_with_positional_bias.1} parent=0 // pred_check_branch
    %2580 = sbr.rel (0) target = $region17
  $region16: #{embed_with_positional_bias.1} parent=0 // pred_region
    _
  $region17: #{embed_with_positional_bias.1} parent=0 // pred_fallthru
    _
  // Predicated region
  $region18: #{embed_with_positional_bias.1} parent=0 // pred_check
    _
  $region19: #{embed_with_positional_bias.1} parent=0 // pred_check_branch
    %2582 = sbr.rel (0) target = $region21
  $region20: #{embed_with_positional_bias.1} parent=0 // pred_region
    _
  $region21: #{embed_with_positional_bias.1} parent=0 // pred_fallthru
    _

</llo_original>
